<compile_context>
chip_gen: v7x
topology: tpu7x:2x2x1
jax: 0.10.0
libtpu: 0.0.40
codegen_flags: <defaults>
</compile_context>

<pallas_src>
import functools

import jax
import jax.numpy as jnp
import numpy as np
from jax.experimental import pallas as pl
from jax.experimental.pallas import tpu as pltpu

LANE = 128
X_DIM = 96          # flattened input features
Z_DIM = 10          # latent size
N_LAYERS = 10       # 11 Linear layers with fc51/fc52 fused -> 10 matmuls
MU_OFF = 96         # mu     at lanes [96, 106) of the packed output slab
LV_OFF = 106        # logvar at lanes [106, 116) of the packed output slab


# -----------------------------------------------------------------------------
# Kernel: full VAE forward for one TILE_N-row slab.
# -----------------------------------------------------------------------------
def vae_kernel(x_ref, eps_ref, w_ref, b_ref, out_ref):
    tile = x_ref.shape[0]

    # Assemble the 128-lane activation in-kernel (no wrapper-side slab in HBM).
    x96 = x_ref[...]                                        # (T, 96) f32
    xin = jnp.concatenate(
        [x96, jnp.zeros((tile, LANE - X_DIM), jnp.float32)], axis=1)

    def layer(h, i, relu=True):
        # bf16 MXU inputs, f32 accumulation; bias/ReLU stay f32 (v5e-safe).
        y = jnp.dot(h.astype(jnp.bfloat16), w_ref[i],
                    preferred_element_type=jnp.float32) + b_ref[i:i + 1, :]
        return jnp.maximum(y, 0.0) if relu else y

    # ---- encoder (fc1..fc4 + fused fc51||fc52 head) ----
    h = layer(xin, 0)                                       # 96 -> 20
    h = layer(h, 1)
    h = layer(h, 2)
    h = layer(h, 3)
    head = layer(h, 4, relu=False)                          # lanes 96..105 mu, 106..115 logvar

    # ---- reparameterize: z = mu + eps * exp(0.5 * logvar) ----
    mu = head[:, MU_OFF:MU_OFF + Z_DIM]
    logvar = head[:, LV_OFF:LV_OFF + Z_DIM]
    eps = eps_ref[...]                                      # (T, 10) f32
    z = mu + eps * jnp.exp(0.5 * logvar)                    # (T, 10) f32
    z128 = jnp.concatenate(
        [z, jnp.zeros((tile, LANE - Z_DIM), jnp.float32)], axis=1)

    # ---- decoder (fc6..fc10, final ReLU per the PyTorch module) ----
    d = layer(z128, 5)                                      # 10 -> 20
    d = layer(d, 6)
    d = layer(d, 7)
    d = layer(d, 8)
    recon = layer(d, 9)                                     # lanes 0..95 recon, 96..127 = 0

    # lane-dense output slab: [recon(96) | mu(10) | logvar(10) | 0(12)]
    # (recon lanes >= 96 and head lanes < 96 are exactly zero -> plain add composes them)
    out_ref[...] = recon + head


# -----------------------------------------------------------------------------
# Parameter construction (mimics nn.Linear's U(-1/sqrt(in), 1/sqrt(in)))
# -----------------------------------------------------------------------------
_LAYER_DIMS = [
    ("fc1", 96, 20), ("fc2", 20, 20), ("fc3", 20, 20), ("fc4", 20, 20),
    ("fc51", 20, 10), ("fc52", 20, 10),
    ("fc6", 10, 20), ("fc7", 20, 20), ("fc8", 20, 20), ("fc9", 20, 20),
    ("fc10", 20, 96),
]


def init_params(key):
    params = []
    for (_, fan_in, fan_out) in _LAYER_DIMS:
        key, kw, kb = jax.random.split(key, 3)
        bound = 1.0 / np.sqrt(fan_in)
        # Stored already transposed: (in, out)
        w = jax.random.uniform(kw, (fan_in, fan_out), jnp.float32, -bound, bound)
        b = jax.random.uniform(kb, (1, fan_out), jnp.float32, -bound, bound)
        params.append((w, b))
    return params


def pack_params(params):
    """Pack 11 (w, b) pairs into one (10, 128, 128) bf16 weight slab + (16, 128) f32 bias slab.

    Call ONCE and reuse the returned device arrays across forward calls.
    fc51/fc52 are fused into slab layer 4, with output columns at lanes [96,106) and
    [106,116) so the head output is already laid out for the lane-dense output slab.
    All padding is zero, so padded lanes stay zero through the whole network.
    """
    wslab = np.zeros((N_LAYERS, LANE, LANE), np.float32)
    bslab = np.zeros((16, LANE), np.float32)

    # encoder trunk: fc1..fc4 -> slab layers 0..3
    for i in range(4):
        w, b = params[i]
        fi, fo = w.shape
        wslab[i, :fi, :fo] = np.asarray(w)
        bslab[i, :fo] = np.asarray(b)[0]

    # fused mu/logvar head -> slab layer 4 (columns shifted to lanes 96..115)
    (w51, b51), (w52, b52) = params[4], params[5]
    wslab[4, :w51.shape[0], MU_OFF:MU_OFF + Z_DIM] = np.asarray(w51)
    wslab[4, :w52.shape[0], LV_OFF:LV_OFF + Z_DIM] = np.asarray(w52)
    bslab[4, MU_OFF:MU_OFF + Z_DIM] = np.asarray(b51)[0]
    bslab[4, LV_OFF:LV_OFF + Z_DIM] = np.asarray(b52)[0]

    # decoder: fc6..fc10 -> slab layers 5..9
    for j, (w, b) in enumerate(params[6:], start=5):
        fi, fo = w.shape
        wslab[j, :fi, :fo] = np.asarray(w)
        bslab[j, :fo] = np.asarray(b)[0]

    # Output-slab composition relies on padded rows/cols/lanes being exactly zero.
    assert not wslab[0, X_DIM:, :].any()                      # eps/pad lanes into fc1
    assert not wslab[4, :, :MU_OFF].any()                     # head cols < 96
    assert not wslab[4, :, LV_OFF + Z_DIM:].any()             # head cols >= 116
    assert not bslab[4, :MU_OFF].any() and not bslab[4, LV_OFF + Z_DIM:].any()
    assert not wslab[5, Z_DIM:, :].any()                      # pad lanes into fc6
    assert not wslab[9, :, X_DIM:].any() and not bslab[9, X_DIM:].any()

    return (jnp.asarray(wslab, dtype=jnp.bfloat16),           # bf16 MXU weights
            jnp.asarray(bslab, dtype=jnp.float32))            # f32 bias (added post-acc)


# -----------------------------------------------------------------------------
# Wrapper
# -----------------------------------------------------------------------------
def _round_up(x, m):
    return (x + m - 1) // m * m


def _choose_tile(n, tile_n):
    """Pick rows-per-grid-step: big tile, >=2 steps when possible, bounded pad waste."""
    n8 = _round_up(n, 8)
    tile = min(_round_up(tile_n, 8), n8)
    # v7x megacore: the "parallel" batch axis is split across the 2 TensorCores per
    # grid step, so keep at least 2 grid steps whenever the batch allows it.
    if tile >= n8 and n8 >= 16:
        tile = _round_up((n8 + 1) // 2, 8)
    # Bound batch-padding waste to ~12.5% by shrinking the tile if needed.
    while tile > 8 and (_round_up(n, tile) - n) * 8 > _round_up(n, tile):
        tile = max(8, _round_up(tile // 2, 8))
    return tile, _round_up(n, tile)


@functools.partial(jax.jit, static_argnames=("tile_n",))
def _vae_call(xf, eps, wslab, bslab, *, tile_n):
    n_pad = xf.shape[0]
    grid = (n_pad // tile_n,)
    return pl.pallas_call(
        vae_kernel,
        out_shape=jax.ShapeDtypeStruct((n_pad, LANE), jnp.float32),
        grid_spec=pltpu.PrefetchScalarGridSpec(
            num_scalar_prefetch=0,
            grid=grid,
            in_specs=[
                # streamed activations: full-last-dim row slabs per grid step
                pl.BlockSpec((tile_n, X_DIM), lambda i: (i, 0)),
                pl.BlockSpec((tile_n, Z_DIM), lambda i: (i, 0)),
                # VMEM-resident packed weights / biases (same block every step)
                pl.BlockSpec((N_LAYERS, LANE, LANE), lambda i: (0, 0, 0)),
                pl.BlockSpec((16, LANE), lambda i: (0, 0)),
            ],
            out_specs=pl.BlockSpec((tile_n, LANE), lambda i: (i, 0)),
        ),
        compiler_params=pltpu.CompilerParams(
            dimension_semantics=("parallel",)),
    )(xf, eps, wslab, bslab)


def vae_forward(x, eps, wslab, bslab, *, tile_n=512):
    """Returns (recon, mu, logvar), matching VAE.forward(x) with external noise eps.

    `wslab`, `bslab` come from pack_params(params) — pack once, reuse every call.
    """
    xf = x.reshape(-1, X_DIM).astype(jnp.float32)       # x.view(-1, 96)
    n = xf.shape[0]
    assert eps.shape == (n, Z_DIM)
    eps = eps.astype(jnp.float32)

    tile, n_pad = _choose_tile(n, tile_n)
    if n_pad != n:
        xf = jnp.pad(xf, ((0, n_pad - n), (0, 0)))
        eps = jnp.pad(eps, ((0, n_pad - n), (0, 0)))

    slab = _vae_call(xf, eps, wslab, bslab, tile_n=tile)
    recon = slab[:n, :X_DIM]
    mu = slab[:n, MU_OFF:MU_OFF + Z_DIM]
    logvar = slab[:n, LV_OFF:LV_OFF + Z_DIM]
    return recon, mu, logvar


# Pure-JAX reference for sanity checking.
def vae_forward_ref(x, params, eps):
    xf = x.reshape(-1, X_DIM).astype(jnp.float32)
    relu = lambda v: jnp.maximum(v, 0.0)
    lin = lambda h, p: h @ p[0] + p[1]
    h = relu(lin(xf, params[0]))
    h = relu(lin(h, params[1]))
    h = relu(lin(h, params[2]))
    h = relu(lin(h, params[3]))
    mu = lin(h, params[4])
    logvar = lin(h, params[5])
    z = mu + eps * jnp.exp(0.5 * logvar)
    d = relu(lin(z, params[6]))
    d = relu(lin(d, params[7]))
    d = relu(lin(d, params[8]))
    d = relu(lin(d, params[9]))
    recon = relu(lin(d, params[10]))
    return recon, mu, logvar


if __name__ == "__main__":
    key = jax.random.PRNGKey(0)
    k_params, k_x, k_eps = jax.random.split(key, 3)

    params = init_params(k_params)
    wslab, bslab = pack_params(params)   # pack + upload ONCE, reuse across forward calls

    # Small example: 64 rows of 96 features (x.view(-1, 96) is identity here);
    # with the default tile this yields a 2-step "parallel" grid (both v7x TCs busy).
    n = 64
    x = jax.random.normal(k_x, (n, X_DIM), jnp.float32)
    eps = jax.random.normal(k_eps, (n, Z_DIM), jnp.float32)  # reparameterization noise

    recon, mu, logvar = vae_forward(x, eps, wslab, bslab)
    jax.block_until_ready((recon, mu, logvar))

    # Numerical sanity check against plain f32 JAX (tolerance sized for bf16 MXU inputs).
    r_ref, m_ref, lv_ref = vae_forward_ref(x, params, eps)
    np.testing.assert_allclose(np.asarray(recon), np.asarray(r_ref), rtol=2e-2, atol=2e-2)
    np.testing.assert_allclose(np.asarray(mu), np.asarray(m_ref), rtol=2e-2, atol=2e-2)
    np.testing.assert_allclose(np.asarray(logvar), np.asarray(lv_ref), rtol=2e-2, atol=2e-2)

    print("KERNEL_OK")
</pallas_src>

<mosaic_0001>
module attributes {stable_mosaic.version = 11 : i64} {
  func.func @vae_kernel(%arg0: i32, %arg1: memref<32x96xf32, #tpu.memory_space<vmem>>, %arg2: memref<32x10xf32, #tpu.memory_space<vmem>>, %arg3: memref<10x128x128xbf16, #tpu.memory_space<vmem>>, %arg4: memref<16x128xf32, #tpu.memory_space<vmem>>, %arg5: memref<32x128xf32, #tpu.memory_space<vmem>>) attributes {dimension_semantics = [#tpu.dimension_semantics<parallel>], iteration_bounds = array<i64: 2>, scalar_prefetch = 0 : i64, scratch_operands = 0 : i64, tpu.core_type = #tpu.core_type<tc>, window_params = [{transform_indices = @transform_0, window_bounds = array<i64: 32, 96>}, {transform_indices = @transform_1, window_bounds = array<i64: 32, 10>}, {pipeline_mode = #tpu.pipeline_mode<synchronous>, transform_indices = @transform_2, window_bounds = array<i64: 10, 128, 128>}, {pipeline_mode = #tpu.pipeline_mode<synchronous>, transform_indices = @transform_3, window_bounds = array<i64: 16, 128>}, {transform_indices = @transform_4, window_bounds = array<i64: 32, 128>}]} {
    %c0 = arith.constant 0 : index
    %c0_0 = arith.constant 0 : index
    %0 = vector.load %arg1[%c0, %c0_0] : memref<32x96xf32, #tpu.memory_space<vmem>>, vector<32x96xf32>
    %cst = arith.constant 0.000000e+00 : f32
    %1 = vector.broadcast %cst : f32 to vector<32x32xf32>
    %2 = tpu.concatenate %0, %1 in 1 : vector<32x96xf32>, vector<32x32xf32> -> vector<32x128xf32>
    %3 = arith.truncf %2 : vector<32x128xf32> to vector<32x128xbf16>
    %c0_1 = arith.constant 0 : index
    %c0_2 = arith.constant 0 : index
    %c0_3 = arith.constant 0 : index
    %4 = vector.load %arg3[%c0_1, %c0_2, %c0_3] : memref<10x128x128xbf16, #tpu.memory_space<vmem>>, vector<1x128x128xbf16>
    %5 = vector.shape_cast %4 : vector<1x128x128xbf16> to vector<128x128xbf16>
    %cst_4 = arith.constant dense<0.000000e+00> : vector<32x128xf32>
    %6 = tpu.matmul %3, %5, %cst_4 {dimension_numbers = #tpu.dot_dimension_numbers<[1], [0], [0], [1], [0, 0, 1, 1], [], []>} : vector<32x128xbf16>, vector<128x128xbf16>, vector<32x128xf32> -> vector<32x128xf32>
    %c0_5 = arith.constant 0 : index
    %c0_6 = arith.constant 0 : index
    %7 = vector.load %arg4[%c0_5, %c0_6] : memref<16x128xf32, #tpu.memory_space<vmem>>, vector<1x128xf32>
    %8 = vector.broadcast %7 : vector<1x128xf32> to vector<32x128xf32>
    %9 = arith.addf %6, %8 : vector<32x128xf32>
    %cst_7 = arith.constant 0.000000e+00 : f32
    %10 = vector.broadcast %cst_7 : f32 to vector<32x128xf32>
    %11 = arith.maximumf %9, %10 : vector<32x128xf32>
    %12 = arith.truncf %11 : vector<32x128xf32> to vector<32x128xbf16>
    %c1 = arith.constant 1 : index
    %c0_8 = arith.constant 0 : index
    %c0_9 = arith.constant 0 : index
    %13 = vector.load %arg3[%c1, %c0_8, %c0_9] : memref<10x128x128xbf16, #tpu.memory_space<vmem>>, vector<1x128x128xbf16>
    %14 = vector.shape_cast %13 : vector<1x128x128xbf16> to vector<128x128xbf16>
    %cst_10 = arith.constant dense<0.000000e+00> : vector<32x128xf32>
    %15 = tpu.matmul %12, %14, %cst_10 {dimension_numbers = #tpu.dot_dimension_numbers<[1], [0], [0], [1], [0, 0, 1, 1], [], []>} : vector<32x128xbf16>, vector<128x128xbf16>, vector<32x128xf32> -> vector<32x128xf32>
    %c1_11 = arith.constant 1 : index
    %c0_12 = arith.constant 0 : index
    %16 = vector.load %arg4[%c1_11, %c0_12] : memref<16x128xf32, #tpu.memory_space<vmem>>, vector<1x128xf32>
    %17 = vector.broadcast %16 : vector<1x128xf32> to vector<32x128xf32>
    %18 = arith.addf %15, %17 : vector<32x128xf32>
    %cst_13 = arith.constant 0.000000e+00 : f32
    %19 = vector.broadcast %cst_13 : f32 to vector<32x128xf32>
    %20 = arith.maximumf %18, %19 : vector<32x128xf32>
    %21 = arith.truncf %20 : vector<32x128xf32> to vector<32x128xbf16>
    %c2 = arith.constant 2 : index
    %c0_14 = arith.constant 0 : index
    %c0_15 = arith.constant 0 : index
    %22 = vector.load %arg3[%c2, %c0_14, %c0_15] : memref<10x128x128xbf16, #tpu.memory_space<vmem>>, vector<1x128x128xbf16>
    %23 = vector.shape_cast %22 : vector<1x128x128xbf16> to vector<128x128xbf16>
    %cst_16 = arith.constant dense<0.000000e+00> : vector<32x128xf32>
    %24 = tpu.matmul %21, %23, %cst_16 {dimension_numbers = #tpu.dot_dimension_numbers<[1], [0], [0], [1], [0, 0, 1, 1], [], []>} : vector<32x128xbf16>, vector<128x128xbf16>, vector<32x128xf32> -> vector<32x128xf32>
    %c2_17 = arith.constant 2 : index
    %c0_18 = arith.constant 0 : index
    %25 = vector.load %arg4[%c2_17, %c0_18] : memref<16x128xf32, #tpu.memory_space<vmem>>, vector<1x128xf32>
    %26 = vector.broadcast %25 : vector<1x128xf32> to vector<32x128xf32>
    %27 = arith.addf %24, %26 : vector<32x128xf32>
    %cst_19 = arith.constant 0.000000e+00 : f32
    %28 = vector.broadcast %cst_19 : f32 to vector<32x128xf32>
    %29 = arith.maximumf %27, %28 : vector<32x128xf32>
    %30 = arith.truncf %29 : vector<32x128xf32> to vector<32x128xbf16>
    %c3 = arith.constant 3 : index
    %c0_20 = arith.constant 0 : index
    %c0_21 = arith.constant 0 : index
    %31 = vector.load %arg3[%c3, %c0_20, %c0_21] : memref<10x128x128xbf16, #tpu.memory_space<vmem>>, vector<1x128x128xbf16>
    %32 = vector.shape_cast %31 : vector<1x128x128xbf16> to vector<128x128xbf16>
    %cst_22 = arith.constant dense<0.000000e+00> : vector<32x128xf32>
    %33 = tpu.matmul %30, %32, %cst_22 {dimension_numbers = #tpu.dot_dimension_numbers<[1], [0], [0], [1], [0, 0, 1, 1], [], []>} : vector<32x128xbf16>, vector<128x128xbf16>, vector<32x128xf32> -> vector<32x128xf32>
    %c3_23 = arith.constant 3 : index
    %c0_24 = arith.constant 0 : index
    %34 = vector.load %arg4[%c3_23, %c0_24] : memref<16x128xf32, #tpu.memory_space<vmem>>, vector<1x128xf32>
    %35 = vector.broadcast %34 : vector<1x128xf32> to vector<32x128xf32>
    %36 = arith.addf %33, %35 : vector<32x128xf32>
    %cst_25 = arith.constant 0.000000e+00 : f32
    %37 = vector.broadcast %cst_25 : f32 to vector<32x128xf32>
    %38 = arith.maximumf %36, %37 : vector<32x128xf32>
    %39 = arith.truncf %38 : vector<32x128xf32> to vector<32x128xbf16>
    %c4 = arith.constant 4 : index
    %c0_26 = arith.constant 0 : index
    %c0_27 = arith.constant 0 : index
    %40 = vector.load %arg3[%c4, %c0_26, %c0_27] : memref<10x128x128xbf16, #tpu.memory_space<vmem>>, vector<1x128x128xbf16>
    %41 = vector.shape_cast %40 : vector<1x128x128xbf16> to vector<128x128xbf16>
    %cst_28 = arith.constant dense<0.000000e+00> : vector<32x128xf32>
    %42 = tpu.matmul %39, %41, %cst_28 {dimension_numbers = #tpu.dot_dimension_numbers<[1], [0], [0], [1], [0, 0, 1, 1], [], []>} : vector<32x128xbf16>, vector<128x128xbf16>, vector<32x128xf32> -> vector<32x128xf32>
    %c4_29 = arith.constant 4 : index
    %c0_30 = arith.constant 0 : index
    %43 = vector.load %arg4[%c4_29, %c0_30] : memref<16x128xf32, #tpu.memory_space<vmem>>, vector<1x128xf32>
    %44 = vector.broadcast %43 : vector<1x128xf32> to vector<32x128xf32>
    %45 = arith.addf %42, %44 : vector<32x128xf32>
    %46 = vector.extract_strided_slice %45 {offsets = [0, 96], sizes = [32, 10], strides = [1, 1]} : vector<32x128xf32> to vector<32x10xf32>
    %47 = vector.extract_strided_slice %45 {offsets = [0, 106], sizes = [32, 10], strides = [1, 1]} : vector<32x128xf32> to vector<32x10xf32>
    %c0_31 = arith.constant 0 : index
    %c0_32 = arith.constant 0 : index
    %48 = vector.load %arg2[%c0_31, %c0_32] : memref<32x10xf32, #tpu.memory_space<vmem>>, vector<32x10xf32>
    %cst_33 = arith.constant 5.000000e-01 : f32
    %49 = vector.broadcast %cst_33 : f32 to vector<32x10xf32>
    %50 = arith.mulf %49, %47 : vector<32x10xf32>
    %51 = math.exp %50 : vector<32x10xf32>
    %52 = arith.mulf %48, %51 : vector<32x10xf32>
    %53 = arith.addf %46, %52 : vector<32x10xf32>
    %cst_34 = arith.constant 0.000000e+00 : f32
    %54 = vector.broadcast %cst_34 : f32 to vector<32x118xf32>
    %55 = tpu.concatenate %53, %54 in 1 : vector<32x10xf32>, vector<32x118xf32> -> vector<32x128xf32>
    %56 = arith.truncf %55 : vector<32x128xf32> to vector<32x128xbf16>
    %c5 = arith.constant 5 : index
    %c0_35 = arith.constant 0 : index
    %c0_36 = arith.constant 0 : index
    %57 = vector.load %arg3[%c5, %c0_35, %c0_36] : memref<10x128x128xbf16, #tpu.memory_space<vmem>>, vector<1x128x128xbf16>
    %58 = vector.shape_cast %57 : vector<1x128x128xbf16> to vector<128x128xbf16>
    %cst_37 = arith.constant dense<0.000000e+00> : vector<32x128xf32>
    %59 = tpu.matmul %56, %58, %cst_37 {dimension_numbers = #tpu.dot_dimension_numbers<[1], [0], [0], [1], [0, 0, 1, 1], [], []>} : vector<32x128xbf16>, vector<128x128xbf16>, vector<32x128xf32> -> vector<32x128xf32>
    %c5_38 = arith.constant 5 : index
    %c0_39 = arith.constant 0 : index
    %60 = vector.load %arg4[%c5_38, %c0_39] : memref<16x128xf32, #tpu.memory_space<vmem>>, vector<1x128xf32>
    %61 = vector.broadcast %60 : vector<1x128xf32> to vector<32x128xf32>
    %62 = arith.addf %59, %61 : vector<32x128xf32>
    %cst_40 = arith.constant 0.000000e+00 : f32
    %63 = vector.broadcast %cst_40 : f32 to vector<32x128xf32>
    %64 = arith.maximumf %62, %63 : vector<32x128xf32>
    %65 = arith.truncf %64 : vector<32x128xf32> to vector<32x128xbf16>
    %c6 = arith.constant 6 : index
    %c0_41 = arith.constant 0 : index
    %c0_42 = arith.constant 0 : index
    %66 = vector.load %arg3[%c6, %c0_41, %c0_42] : memref<10x128x128xbf16, #tpu.memory_space<vmem>>, vector<1x128x128xbf16>
    %67 = vector.shape_cast %66 : vector<1x128x128xbf16> to vector<128x128xbf16>
    %cst_43 = arith.constant dense<0.000000e+00> : vector<32x128xf32>
    %68 = tpu.matmul %65, %67, %cst_43 {dimension_numbers = #tpu.dot_dimension_numbers<[1], [0], [0], [1], [0, 0, 1, 1], [], []>} : vector<32x128xbf16>, vector<128x128xbf16>, vector<32x128xf32> -> vector<32x128xf32>
    %c6_44 = arith.constant 6 : index
    %c0_45 = arith.constant 0 : index
    %69 = vector.load %arg4[%c6_44, %c0_45] : memref<16x128xf32, #tpu.memory_space<vmem>>, vector<1x128xf32>
    %70 = vector.broadcast %69 : vector<1x128xf32> to vector<32x128xf32>
    %71 = arith.addf %68, %70 : vector<32x128xf32>
    %cst_46 = arith.constant 0.000000e+00 : f32
    %72 = vector.broadcast %cst_46 : f32 to vector<32x128xf32>
    %73 = arith.maximumf %71, %72 : vector<32x128xf32>
    %74 = arith.truncf %73 : vector<32x128xf32> to vector<32x128xbf16>
    %c7 = arith.constant 7 : index
    %c0_47 = arith.constant 0 : index
    %c0_48 = arith.constant 0 : index
    %75 = vector.load %arg3[%c7, %c0_47, %c0_48] : memref<10x128x128xbf16, #tpu.memory_space<vmem>>, vector<1x128x128xbf16>
    %76 = vector.shape_cast %75 : vector<1x128x128xbf16> to vector<128x128xbf16>
    %cst_49 = arith.constant dense<0.000000e+00> : vector<32x128xf32>
    %77 = tpu.matmul %74, %76, %cst_49 {dimension_numbers = #tpu.dot_dimension_numbers<[1], [0], [0], [1], [0, 0, 1, 1], [], []>} : vector<32x128xbf16>, vector<128x128xbf16>, vector<32x128xf32> -> vector<32x128xf32>
    %c7_50 = arith.constant 7 : index
    %c0_51 = arith.constant 0 : index
    %78 = vector.load %arg4[%c7_50, %c0_51] : memref<16x128xf32, #tpu.memory_space<vmem>>, vector<1x128xf32>
    %79 = vector.broadcast %78 : vector<1x128xf32> to vector<32x128xf32>
    %80 = arith.addf %77, %79 : vector<32x128xf32>
    %cst_52 = arith.constant 0.000000e+00 : f32
    %81 = vector.broadcast %cst_52 : f32 to vector<32x128xf32>
    %82 = arith.maximumf %80, %81 : vector<32x128xf32>
    %83 = arith.truncf %82 : vector<32x128xf32> to vector<32x128xbf16>
    %c8 = arith.constant 8 : index
    %c0_53 = arith.constant 0 : index
    %c0_54 = arith.constant 0 : index
    %84 = vector.load %arg3[%c8, %c0_53, %c0_54] : memref<10x128x128xbf16, #tpu.memory_space<vmem>>, vector<1x128x128xbf16>
    %85 = vector.shape_cast %84 : vector<1x128x128xbf16> to vector<128x128xbf16>
    %cst_55 = arith.constant dense<0.000000e+00> : vector<32x128xf32>
    %86 = tpu.matmul %83, %85, %cst_55 {dimension_numbers = #tpu.dot_dimension_numbers<[1], [0], [0], [1], [0, 0, 1, 1], [], []>} : vector<32x128xbf16>, vector<128x128xbf16>, vector<32x128xf32> -> vector<32x128xf32>
    %c8_56 = arith.constant 8 : index
    %c0_57 = arith.constant 0 : index
    %87 = vector.load %arg4[%c8_56, %c0_57] : memref<16x128xf32, #tpu.memory_space<vmem>>, vector<1x128xf32>
    %88 = vector.broadcast %87 : vector<1x128xf32> to vector<32x128xf32>
    %89 = arith.addf %86, %88 : vector<32x128xf32>
    %cst_58 = arith.constant 0.000000e+00 : f32
    %90 = vector.broadcast %cst_58 : f32 to vector<32x128xf32>
    %91 = arith.maximumf %89, %90 : vector<32x128xf32>
    %92 = arith.truncf %91 : vector<32x128xf32> to vector<32x128xbf16>
    %c9 = arith.constant 9 : index
    %c0_59 = arith.constant 0 : index
    %c0_60 = arith.constant 0 : index
    %93 = vector.load %arg3[%c9, %c0_59, %c0_60] : memref<10x128x128xbf16, #tpu.memory_space<vmem>>, vector<1x128x128xbf16>
    %94 = vector.shape_cast %93 : vector<1x128x128xbf16> to vector<128x128xbf16>
    %cst_61 = arith.constant dense<0.000000e+00> : vector<32x128xf32>
    %95 = tpu.matmul %92, %94, %cst_61 {dimension_numbers = #tpu.dot_dimension_numbers<[1], [0], [0], [1], [0, 0, 1, 1], [], []>} : vector<32x128xbf16>, vector<128x128xbf16>, vector<32x128xf32> -> vector<32x128xf32>
    %c9_62 = arith.constant 9 : index
    %c0_63 = arith.constant 0 : index
    %96 = vector.load %arg4[%c9_62, %c0_63] : memref<16x128xf32, #tpu.memory_space<vmem>>, vector<1x128xf32>
    %97 = vector.broadcast %96 : vector<1x128xf32> to vector<32x128xf32>
    %98 = arith.addf %95, %97 : vector<32x128xf32>
    %cst_64 = arith.constant 0.000000e+00 : f32
    %99 = vector.broadcast %cst_64 : f32 to vector<32x128xf32>
    %100 = arith.maximumf %98, %99 : vector<32x128xf32>
    %101 = arith.addf %100, %45 : vector<32x128xf32>
    %c0_65 = arith.constant 0 : index
    %c0_66 = arith.constant 0 : index
    %102 = vector.load %arg5[%c0_65, %c0_66] : memref<32x128xf32, #tpu.memory_space<vmem>>, vector<32x128xf32>
    tpu.vector_store %arg5[%c0_65, %c0_66], %101 {strides = array<i32>} : memref<32x128xf32, #tpu.memory_space<vmem>>, vector<32x128xf32>,
    return
  }
  func.func @transform_0(%arg0: i32) -> (i32, i32) {
    %c0_i32 = arith.constant 0 : i32
    %c0_i32_0 = arith.constant 0 : i32
    return %arg0, %c0_i32 : i32, i32
  }
  func.func @transform_1(%arg0: i32) -> (i32, i32) {
    %c0_i32 = arith.constant 0 : i32
    %c0_i32_0 = arith.constant 0 : i32
    return %arg0, %c0_i32 : i32, i32
  }
  func.func @transform_2(%arg0: i32) -> (i32, i32, i32) {
    %c0_i32 = arith.constant 0 : i32
    %c0_i32_0 = arith.constant 0 : i32
    %c0_i32_1 = arith.constant 0 : i32
    %c0_i32_2 = arith.constant 0 : i32
    return %c0_i32, %c0_i32_0, %c0_i32_1 : i32, i32, i32
  }
  func.func @transform_3(%arg0: i32) -> (i32, i32) {
    %c0_i32 = arith.constant 0 : i32
    %c0_i32_0 = arith.constant 0 : i32
    %c0_i32_1 = arith.constant 0 : i32
    return %c0_i32, %c0_i32_0 : i32, i32
  }
  func.func @transform_4(%arg0: i32) -> (i32, i32) {
    %c0_i32 = arith.constant 0 : i32
    %c0_i32_0 = arith.constant 0 : i32
    return %arg0, %c0_i32 : i32, i32
  }
}

</mosaic_0001>

<llo_original>
// kernel: _vae_call.1
$region0: #{_vae_call.1}
  #allocation0 [shape = 'u32[]', space=smem, size = 0x4, offset = 0x4, fixed_abs, tag = 'smem constant byte address 0x4 - core index']
  #allocation1 [shape = 'u32[144,128]{1,0:T(1,128)}', space=vmem, size = 0x12000, scoped, tag = 'internal scratch']
  %s0 = inlined_call_operand.vmem [shape: f32[64,96], index: 0, kind: input, shape index: {}]
  %s1 = inlined_call_operand.vmem [shape: f32[64,10], index: 1, kind: input, shape index: {}]
  %s2 = inlined_call_operand.hbm [shape: bf16[10,128,128], index: 2, kind: input, shape index: {}]
  %s3 = inlined_call_operand.vmem [shape: f32[16,128], index: 3, kind: input, shape index: {}]
  %s4 = inlined_call_operand.hbm [shape: f32[64,128], index: 4, kind: output, shape index: {}]
  %s5 = sld [smem:[#allocation0]]
  $region53: #{_vae_call.1} parent=0
    _
  %s7 = ssub.s32 1, %s5
  %s8 = scalar_select 0, %s7, %s5
  $region1: #{_vae_call.1} parent=0
    #allocation2 [shape = 'u8[327680]{0}', space=vmem, size = 0x50000, scoped, tag = 'input window, operand 2, single buffered']
    #allocation3 [shape = 's32[2]{0}', space=sflag, size = 0x8, scoped, tag = 'scoped memory for _vae_call.1']
    #allocation4 [shape = 's32[2]{0}', space=sflag, size = 0x8, scoped, tag = 'scoped memory for _vae_call.1']
    #allocation5 [shape = 'u8[32768]{0}', space=vmem, size = 0x8000, scoped, tag = 'output window, operand 0']
    %9 = vsyncpa [#allocation3], 0
    %10 = vsyncpa [#allocation4], 0
    %s11 = scalar_lea.sflag [#allocation4], 1
    %12 = vsyncpa %s11, 0
    loop: start=0, step=1, limit=4
    $region2: #{_vae_call.1} parent=1 // loop_pre_header
      _
    $region3: #{_vae_call.1} parent=1 // loop_header
      %s14 = sphi 0, %s18
      %p15 = scmp.ge.s32.totalorder %s14, 4
      %s24 = sphi 0, %s26
      %s27 = sphi 0, %s24
      %s28 = sphi 0, %s27
      %s44 = sphi 0, %s28
      %s50 = sphi 0, %s52
      %s53 = sphi 0, %s50
      %s54 = sphi 0, %s53
      %s70 = sphi 0, %s54
      %s74 = sphi 0, %s74
      %s76 = sphi 0, %s74
      %s77 = sphi 0, %s76
      %s91 = sphi 0, %s77
      %s95 = sphi 0, %s95
      %s97 = sphi 0, %s95
      %s98 = sphi 0, %s97
      %s112 = sphi 0, %s98
      %s118 = sphi 0, %s120
      %s121 = sphi 0, %s118
      %s122 = sphi 0, %s121
      %s138 = sphi 0, %s122
    $region4: #{_vae_call.1} parent=1 // loop_header_branch
      %17 = sbr.rel (%p15) target = $region8
    $region5: #{_vae_call.1} parent=1 // loop_body
      %s19 = ssub.s32 %s14, 1
      %s20 = ssub.s32 %s14, 2
      %s21 = sadd.s32 %s14, 1
      %s22 = ssub.s32 %s14, %s21
      %p23 = scmp.eq.s32.totalorder %s22, 0
      %s25 = sadd.s32 %s24, 1
      %s26 = scalar_select %p23, %s24, %s25
      %p29 = pneg %p23
      %p30 = scmp.eq.s32.totalorder %s14, 1
      %p31 = por %p29, %p30
      %p32 = scmp.ne.s32.totalorder %s24, %s27
      %p33 = scmp.eq.s32.totalorder %s14, 0
      %p34 = por %p32, %p33
      %p35 = scmp.ne.s32.totalorder %s24, %s27
      %p36 = scmp.eq.s32.totalorder %s19, 1
      %p37 = por %p35, %p36
      %p38 = scmp.ne.s32.totalorder %s27, %s28
      %p39 = scmp.eq.s32.totalorder %s19, 0
      %p40 = por %p38, %p39
      %p41 = scmp.ne.s32.totalorder %s27, %s28
      %p42 = scmp.eq.s32.totalorder %s20, 1
      %p43 = por %p41, %p42
      %p45 = scmp.ne.s32.totalorder %s28, %s44
      %p46 = scmp.eq.s32.totalorder %s20, 0
      %p47 = por %p45, %p46
      %s48 = ssub.s32 %s14, %s21
      %p49 = scmp.eq.s32.totalorder %s48, 0
      %s51 = sadd.s32 %s50, 1
      %s52 = scalar_select %p49, %s50, %s51
      %p55 = pneg %p49
      %p56 = scmp.eq.s32.totalorder %s14, 1
      %p57 = por %p55, %p56
      %p58 = scmp.ne.s32.totalorder %s50, %s53
      %p59 = scmp.eq.s32.totalorder %s14, 0
      %p60 = por %p58, %p59
      %p61 = scmp.ne.s32.totalorder %s50, %s53
      %p62 = scmp.eq.s32.totalorder %s19, 1
      %p63 = por %p61, %p62
      %p64 = scmp.ne.s32.totalorder %s53, %s54
      %p65 = scmp.eq.s32.totalorder %s19, 0
      %p66 = por %p64, %p65
      %p67 = scmp.ne.s32.totalorder %s53, %s54
      %p68 = scmp.eq.s32.totalorder %s20, 1
      %p69 = por %p67, %p68
      %p71 = scmp.ne.s32.totalorder %s54, %s70
      %p72 = scmp.eq.s32.totalorder %s20, 0
      %p73 = por %p71, %p72
      %s75 = sadd.s32 %s74, 1
      %p78 = scmp.eq.s32.totalorder %s14, 1
      %p79 = scmp.ne.s32.totalorder %s74, %s76
      %p80 = scmp.eq.s32.totalorder %s14, 0
      %p81 = por %p79, %p80
      %p82 = scmp.ne.s32.totalorder %s74, %s76
      %p83 = scmp.eq.s32.totalorder %s19, 1
      %p84 = por %p82, %p83
      %p85 = scmp.ne.s32.totalorder %s76, %s77
      %p86 = scmp.eq.s32.totalorder %s19, 0
      %p87 = por %p85, %p86
      %p88 = scmp.ne.s32.totalorder %s76, %s77
      %p89 = scmp.eq.s32.totalorder %s20, 1
      %p90 = por %p88, %p89
      %p92 = scmp.ne.s32.totalorder %s77, %s91
      %p93 = scmp.eq.s32.totalorder %s20, 0
      %p94 = por %p92, %p93
      %s96 = sadd.s32 %s95, 1
      %p99 = scmp.eq.s32.totalorder %s14, 1
      %p100 = scmp.ne.s32.totalorder %s95, %s97
      %p101 = scmp.eq.s32.totalorder %s14, 0
      %p102 = por %p100, %p101
      %p103 = scmp.ne.s32.totalorder %s95, %s97
      %p104 = scmp.eq.s32.totalorder %s19, 1
      %p105 = por %p103, %p104
      %p106 = scmp.ne.s32.totalorder %s97, %s98
      %p107 = scmp.eq.s32.totalorder %s19, 0
      %p108 = por %p106, %p107
      %p109 = scmp.ne.s32.totalorder %s97, %s98
      %p110 = scmp.eq.s32.totalorder %s20, 1
      %p111 = por %p109, %p110
      %p113 = scmp.ne.s32.totalorder %s98, %s112
      %p114 = scmp.eq.s32.totalorder %s20, 0
      %p115 = por %p113, %p114
      %s116 = ssub.s32 %s14, %s21
      %p117 = scmp.eq.s32.totalorder %s116, 0
      %s119 = sadd.s32 %s118, 1
      %s120 = scalar_select %p117, %s118, %s119
      %p123 = pneg %p117
      %p124 = scmp.eq.s32.totalorder %s14, 1
      %p125 = por %p123, %p124
      %p126 = scmp.ne.s32.totalorder %s118, %s121
      %p127 = scmp.eq.s32.totalorder %s14, 0
      %p128 = por %p126, %p127
      %p129 = scmp.ne.s32.totalorder %s118, %s121
      %p130 = scmp.eq.s32.totalorder %s19, 1
      %p131 = por %p129, %p130
      %p132 = scmp.ne.s32.totalorder %s121, %s122
      %p133 = scmp.eq.s32.totalorder %s19, 0
      %p134 = por %p132, %p133
      %p135 = scmp.ne.s32.totalorder %s121, %s122
      %p136 = scmp.eq.s32.totalorder %s20, 1
      %p137 = por %p135, %p136
      %p139 = scmp.ne.s32.totalorder %s122, %s138
      %p140 = scmp.eq.s32.totalorder %s20, 0
      %p141 = por %p139, %p140
      %p142 = scmp.le.s32.totalorder 1, %s14
      %p143 = scmp.lt.s32.totalorder %s14, 3
      %p144 = pnand %p142, %p143
      %p145 = pneg %p144
      // Predicated region
      $region9: #{_vae_call.1} parent=5 // pred_check
        _
      $region10: #{_vae_call.1} parent=5 // pred_check_branch
        %147 = sbr.rel (%p144) target = $region12
      $region11: #{_vae_call.1} parent=5 // pred_region
        %s148 = ssub.s32 %s14, 1
        // Predicated region
        $region13: #{_vae_call.1} parent=11 // pred_check
          %p149 = pneg %p87
        $region14: #{_vae_call.1} parent=11 // pred_check_branch
          %151 = sbr.rel (%p149) target = $region16
        $region15: #{_vae_call.1} parent=11 // pred_region
          %s153 = ssub.s32 10240, 10240
          %154 = vsyncadd [#allocation3], %s153
          %s155 = sshll.u32 [#allocation2], 4
          %s156 = int_to_ptr.vmem [resolvable:$true] %s155
          %161 = dma.hbm_to_vmem [thread:$0]  %s2, 10240, %s156, [#allocation3], 64, 64, 4
        $region16: #{_vae_call.1} parent=11 // pred_fallthru
          _
        // Predicated region
        $region17: #{_vae_call.1} parent=11 // pred_check
          %p162 = pneg %p108
        $region18: #{_vae_call.1} parent=11 // pred_check_branch
          %164 = sbr.rel (%p162) target = $region20
        $region19: #{_vae_call.1} parent=11 // pred_region
          _
        $region20: #{_vae_call.1} parent=11 // pred_fallthru
          _
      $region12: #{_vae_call.1} parent=5 // pred_fallthru
        _
      %p165 = scmp.lt.s32.totalorder %s14, 2
      // Predicated region
      $region21: #{_vae_call.1} parent=5 // pred_check
        %p166 = pneg %p165
      $region22: #{_vae_call.1} parent=5 // pred_check_branch
        %168 = sbr.rel (%p166) target = $region24
      $region23: #{_vae_call.1} parent=5 // pred_region
        // Predicated region
        $region25: #{_vae_call.1} parent=23 // pred_check
          %p169 = pneg %p34
        $region26: #{_vae_call.1} parent=23 // pred_check_branch
          %171 = sbr.rel (%p169) target = $region28
        $region27: #{_vae_call.1} parent=23 // pred_region
          %s172 = smul.u32 4, %s14
          %p173 = scmp.lt.s32.totalorder %s172, 7
          %s174 = scalar_select %p173, %s172, 7
          %s175 = smul.addr %s174, 8
          %s176 = scalar_lea.vmem %s0, %s175
          %s177 = smul.u32 4, %s14
        $region28: #{_vae_call.1} parent=23 // pred_fallthru
          _
        // Predicated region
        $region29: #{_vae_call.1} parent=23 // pred_check
          %p178 = pneg %p60
        $region30: #{_vae_call.1} parent=23 // pred_check_branch
          %180 = sbr.rel (%p178) target = $region32
        $region31: #{_vae_call.1} parent=23 // pred_region
          %s181 = smul.u32 4, %s14
          %p182 = scmp.lt.s32.totalorder %s181, 7
          %s183 = scalar_select %p182, %s181, 7
          %s184 = smul.addr %s183, 8
          %s185 = scalar_lea.vmem %s1, %s184
          %s186 = smul.u32 4, %s14
        $region32: #{_vae_call.1} parent=23 // pred_fallthru
          _
      $region24: #{_vae_call.1} parent=5 // pred_fallthru
        _
      %p187 = scmp.le.s32.totalorder 1, %s14
      %p188 = scmp.lt.s32.totalorder %s14, 3
      %p189 = pnand %p187, %p188
      %p190 = pneg %p189
      // Predicated region
      $region33: #{_vae_call.1} parent=5 // pred_check
        _
      $region34: #{_vae_call.1} parent=5 // pred_check_branch
        %192 = sbr.rel (%p189) target = $region36
      $region35: #{_vae_call.1} parent=5 // pred_region
        %s193 = ssub.s32 %s14, 1
        // Predicated region
        $region37: #{_vae_call.1} parent=35 // pred_check
          %p194 = pneg %p87
        $region38: #{_vae_call.1} parent=35 // pred_check_branch
          %196 = sbr.rel (%p194) target = $region40
        $region39: #{_vae_call.1} parent=35 // pred_region
          %197 = dma.done [#allocation3], 10240
        $region40: #{_vae_call.1} parent=35 // pred_fallthru
          _
        %s198 = smul.u32 4, %s19
        %p199 = scmp.lt.s32.totalorder %s198, 7
        %s200 = scalar_select %p199, %s198, 7
        %s201 = smul.addr %s200, 8
        %s202 = scalar_lea.vmem %s0, %s201
        %p203 = pneg %p40
        %p204 = pneg %p37
        %s205 = smul.u32 4, %s19
        %p206 = scmp.lt.s32.totalorder %s205, 7
        %s207 = scalar_select %p206, %s205, 7
        %s208 = smul.addr %s207, 8
        %s209 = scalar_lea.vmem %s1, %s208
        %p210 = pneg %p66
        %p211 = pneg %p63
        %p212 = pneg %p87
        %p213 = pneg %p84
        %p214 = pneg %p108
        %p215 = pneg %p105
        %p216 = pneg %p134
        %p217 = pneg %p131
        %s218 = sand.u32 %s121, 1
        %s219 = scalar_lea.sflag [#allocation4], %s218
        %s220 = sand.u32 %s121, 1
        %s221 = smul.addr %s220, 32
        %s222 = scalar_lea.vmem [#allocation5], %s221
        %s223 = smul.u32 4, %s19
        %p224 = scmp.lt.s32.totalorder %s223, 7
        %s225 = scalar_select %p224, %s223, 7
        %s226 = smul.addr %s225, 8
        %s227 = scalar_lea.vmem %s0, %s226
        %s228 = smul.u32 4, %s19
        %s229 = smul.u32 4, %s19
        %p230 = scmp.lt.s32.totalorder %s229, 7
        %s231 = scalar_select %p230, %s229, 7
        %s232 = smul.addr %s231, 8
        %s233 = scalar_lea.vmem %s1, %s232
        %s234 = smul.u32 4, %s19
        %s235 = smul.u32 4, %s19
        %v237 = vld [vmem:[%s227] sm:$0xff]
        %v238 = vld [vmem:[%s227 + $0x8] sm:$0xff]
        %v239 = vld [vmem:[%s227 + $0x10] sm:$0xff]
        %v240 = vld [vmem:[%s227 + $0x18] sm:$0xff]
        %vm241 = vcmask 785408
        %v242 = vsel %vm241, %v237, 0.0
        %v243 = vsel %vm241, %v238, 0.0
        %v244 = vsel %vm241, %v239, 0.0
        %v245 = vsel %vm241, %v240, 0.0
        %v246 = vpack.c.bf16 %v243, %v242
        %v247 = vpack.c.bf16 %v245, %v244
        %v248 = vld [vmem:[#allocation2] sm:$0xf]
        %v249 = vld [vmem:[#allocation2 + $0x4] sm:$0xf]
        %v250 = vld [vmem:[#allocation2 + $0x8] sm:$0xf]
        %v251 = vld [vmem:[#allocation2 + $0xc] sm:$0xf]
        %v252 = vld [vmem:[#allocation2 + $0x10] sm:$0xf]
        %v253 = vld [vmem:[#allocation2 + $0x14] sm:$0xf]
        %v254 = vld [vmem:[#allocation2 + $0x18] sm:$0xf]
        %v255 = vld [vmem:[#allocation2 + $0x1c] sm:$0xf]
        %v256 = vld [vmem:[#allocation2 + $0x20] sm:$0xf]
        %v257 = vld [vmem:[#allocation2 + $0x24] sm:$0xf]
        %v258 = vld [vmem:[#allocation2 + $0x28] sm:$0xf]
        %v259 = vld [vmem:[#allocation2 + $0x2c] sm:$0xf]
        %v260 = vld [vmem:[#allocation2 + $0x30] sm:$0xf]
        %v261 = vld [vmem:[#allocation2 + $0x34] sm:$0xf]
        %v262 = vld [vmem:[#allocation2 + $0x38] sm:$0xf]
        %v263 = vld [vmem:[#allocation2 + $0x3c] sm:$0xf]
        %v264 = vld [vmem:[%s3] sm:$0x1]
        %v265 = vlaneseq
        %v266 = vshrl.u32 %v265, 7
        %v267 = vsub.s32 0, %v266
        %v268 = vrot.slane %v264, %v267
        %v285 = vunpack.c.l.b16 %v248
        %v286 = vunpack.c.l.b16 %v249
        %v287 = vunpack.c.l.b16 %v250
        %v288 = vunpack.c.l.b16 %v251
        %v289 = vunpack.c.l.b16 %v252
        %v290 = vunpack.c.l.b16 %v253
        %v291 = vunpack.c.l.b16 %v254
        %v292 = vunpack.c.l.b16 %v255
        %v293 = vunpack.c.l.b16 %v256
        %v294 = vunpack.c.l.b16 %v257
        %v295 = vunpack.c.l.b16 %v258
        %v296 = vunpack.c.l.b16 %v259
        %v297 = vunpack.c.l.b16 %v260
        %v298 = vunpack.c.l.b16 %v261
        %v299 = vunpack.c.l.b16 %v262
        %v300 = vunpack.c.l.b16 %v263
        %v301 = vpack.c.b16 %v286, %v285
        %v302 = vpack.c.b16 %v288, %v287
        %v303 = vpack.c.b16 %v290, %v289
        %v304 = vpack.c.b16 %v292, %v291
        %v305 = vpack.c.b16 %v294, %v293
        %v306 = vpack.c.b16 %v296, %v295
        %v307 = vpack.c.b16 %v298, %v297
        %v308 = vpack.c.b16 %v300, %v299
        %317 = vmatprep.subr.bf16.mxu0 0
        %318 = vmatpush1.bf16.msra.mxu0 %v301
        %319 = vmatprep.subr.bf16.mxu0 0
        %320 = vmatpush1.bf16.msra.mxu0 %v302
        %321 = vmatprep.subr.bf16.mxu0 0
        %322 = vmatpush1.bf16.msra.mxu0 %v303
        %323 = vmatprep.subr.bf16.mxu0 0
        %324 = vmatpush1.bf16.msra.mxu0 %v304
        %325 = vmatprep.subr.bf16.mxu0 0
        %326 = vmatpush1.bf16.msra.mxu0 %v305
        %327 = vmatprep.subr.bf16.mxu0 0
        %328 = vmatpush1.bf16.msra.mxu0 %v306
        %329 = vmatprep.subr.bf16.mxu0 0
        %330 = vmatpush1.bf16.msra.mxu0 %v307
        %331 = vmatprep.subr.bf16.mxu0 0
        %332 = vmatpush1.bf16.msra.mxu0 %v308
        %333 = vmatprep.subr.bf16.mxu0 0
        %334 = vmatpush1.bf16.msra.mxu0 0
        %335 = vmatprep.subr.bf16.mxu0 0
        %336 = vmatpush1.bf16.msra.mxu0 0
        %337 = vmatprep.subr.bf16.mxu0 0
        %338 = vmatpush1.bf16.msra.mxu0 0
        %339 = vmatprep.subr.bf16.mxu0 0
        %340 = vmatpush1.bf16.msra.mxu0 0
        %341 = vmatprep.subr.bf16.mxu0 0
        %342 = vmatpush1.bf16.msra.mxu0 0
        %343 = vmatprep.subr.bf16.mxu0 0
        %344 = vmatpush1.bf16.msra.mxu0 0
        %345 = vmatprep.subr.bf16.mxu0 0
        %346 = vmatpush1.bf16.msra.mxu0 0
        %347 = vmatprep.subr.bf16.mxu0 0
        %348 = vmatpush1.bf16.msra.mxu0 0
        %349 = vmatprep.mubr.bf16.mxu0 0
        %350 = vmatmul.mubr.bf16.gmra.mrb[0].mxu0 %v246
        %v351 = vpop.f32.mrb[0].mxu0
        %v352 = vadd.f32 %v268, %v351
        %v353 = vpop.f32.mrb[0].mxu0
        %v354 = vpop.f32.mrb[0].mxu0
        %v355 = vadd.f32 %v268, %v354
        %v356 = vpop.f32.mrb[0].mxu0
        %357 = vmatprep.mubr.bf16.mxu0 0
        %358 = vmatmul.mubr.bf16.gmra.mrb[0].mxu0 %v247
        %v359 = vpop.f32.mrb[0].mxu0
        %v360 = vadd.f32 %v268, %v359
        %v361 = vpop.f32.mrb[0].mxu0
        %v362 = vpop.f32.mrb[0].mxu0
        %v363 = vadd.f32 %v268, %v362
        %v364 = vpop.f32.mrb[0].mxu0
        %365 = vdwg.mxu0
        %v366 = vmax.f32 %v352, 0.0
        %v367 = vmax.f32 %v355, 0.0
        %v368 = vmax.f32 %v360, 0.0
        %v369 = vmax.f32 %v363, 0.0
        %v370 = vpack.c.bf16 %v367, %v366
        %v371 = vpack.c.bf16 %v369, %v368
        %s372 = scalar_lea.vmem [#allocation2], 64
        %v373 = vld [vmem:[%s372] sm:$0xf]
        %v374 = vld [vmem:[%s372 + $0x4] sm:$0xf]
        %v375 = vld [vmem:[%s372 + $0x8] sm:$0xf]
        %v376 = vld [vmem:[%s372 + $0xc] sm:$0xf]
        %v377 = vld [vmem:[%s372 + $0x10] sm:$0xf]
        %v378 = vld [vmem:[%s372 + $0x14] sm:$0xf]
        %v379 = vld [vmem:[%s372 + $0x18] sm:$0xf]
        %v380 = vld [vmem:[%s372 + $0x1c] sm:$0xf]
        %v381 = vld [vmem:[%s372 + $0x20] sm:$0xf]
        %v382 = vld [vmem:[%s372 + $0x24] sm:$0xf]
        %v383 = vld [vmem:[%s372 + $0x28] sm:$0xf]
        %v384 = vld [vmem:[%s372 + $0x2c] sm:$0xf]
        %v385 = vld [vmem:[%s372 + $0x30] sm:$0xf]
        %v386 = vld [vmem:[%s372 + $0x34] sm:$0xf]
        %v387 = vld [vmem:[%s372 + $0x38] sm:$0xf]
        %v388 = vld [vmem:[%s372 + $0x3c] sm:$0xf]
        %v389 = vld [vmem:[%s3 + $0x1] sm:$0x1]
        %v390 = vlaneseq
        %v391 = vshrl.u32 %v390, 7
        %v392 = vsub.s32 0, %v391
        %v393 = vrot.slane %v389, %v392
        %v410 = vunpack.c.l.b16 %v373
        %v411 = vunpack.c.l.b16 %v374
        %v412 = vunpack.c.l.b16 %v375
        %v413 = vunpack.c.l.b16 %v376
        %v414 = vunpack.c.l.b16 %v377
        %v415 = vunpack.c.l.b16 %v378
        %v416 = vunpack.c.l.b16 %v379
        %v417 = vunpack.c.l.b16 %v380
        %v418 = vunpack.c.l.b16 %v381
        %v419 = vunpack.c.l.b16 %v382
        %v420 = vunpack.c.l.b16 %v383
        %v421 = vunpack.c.l.b16 %v384
        %v422 = vunpack.c.l.b16 %v385
        %v423 = vunpack.c.l.b16 %v386
        %v424 = vunpack.c.l.b16 %v387
        %v425 = vunpack.c.l.b16 %v388
        %v426 = vpack.c.b16 %v411, %v410
        %v427 = vpack.c.b16 %v413, %v412
        %v428 = vpack.c.b16 %v415, %v414
        %v429 = vpack.c.b16 %v417, %v416
        %v430 = vpack.c.b16 %v419, %v418
        %v431 = vpack.c.b16 %v421, %v420
        %v432 = vpack.c.b16 %v423, %v422
        %v433 = vpack.c.b16 %v425, %v424
        %442 = vmatprep.subr.bf16.mxu0 0
        %443 = vmatpush1.bf16.msra.mxu0 %v426
        %444 = vmatprep.subr.bf16.mxu0 0
        %445 = vmatpush1.bf16.msra.mxu0 %v427
        %446 = vmatprep.subr.bf16.mxu0 0
        %447 = vmatpush1.bf16.msra.mxu0 %v428
        %448 = vmatprep.subr.bf16.mxu0 0
        %449 = vmatpush1.bf16.msra.mxu0 %v429
        %450 = vmatprep.subr.bf16.mxu0 0
        %451 = vmatpush1.bf16.msra.mxu0 %v430
        %452 = vmatprep.subr.bf16.mxu0 0
        %453 = vmatpush1.bf16.msra.mxu0 %v431
        %454 = vmatprep.subr.bf16.mxu0 0
        %455 = vmatpush1.bf16.msra.mxu0 %v432
        %456 = vmatprep.subr.bf16.mxu0 0
        %457 = vmatpush1.bf16.msra.mxu0 %v433
        %458 = vmatprep.subr.bf16.mxu0 0
        %459 = vmatpush1.bf16.msra.mxu0 0
        %460 = vmatprep.subr.bf16.mxu0 0
        %461 = vmatpush1.bf16.msra.mxu0 0
        %462 = vmatprep.subr.bf16.mxu0 0
        %463 = vmatpush1.bf16.msra.mxu0 0
        %464 = vmatprep.subr.bf16.mxu0 0
        %465 = vmatpush1.bf16.msra.mxu0 0
        %466 = vmatprep.subr.bf16.mxu0 0
        %467 = vmatpush1.bf16.msra.mxu0 0
        %468 = vmatprep.subr.bf16.mxu0 0
        %469 = vmatpush1.bf16.msra.mxu0 0
        %470 = vmatprep.subr.bf16.mxu0 0
        %471 = vmatpush1.bf16.msra.mxu0 0
        %472 = vmatprep.subr.bf16.mxu0 0
        %473 = vmatpush1.bf16.msra.mxu0 0
        %474 = vmatprep.mubr.bf16.mxu0 0
        %475 = vmatmul.mubr.bf16.gmra.mrb[0].mxu0 %v370
        %v476 = vpop.f32.mrb[0].mxu0
        %v477 = vadd.f32 %v393, %v476
        %v478 = vpop.f32.mrb[0].mxu0
        %v479 = vpop.f32.mrb[0].mxu0
        %v480 = vadd.f32 %v393, %v479
        %v481 = vpop.f32.mrb[0].mxu0
        %482 = vmatprep.mubr.bf16.mxu0 0
        %483 = vmatmul.mubr.bf16.gmra.mrb[0].mxu0 %v371
        %v484 = vpop.f32.mrb[0].mxu0
        %v485 = vadd.f32 %v393, %v484
        %v486 = vpop.f32.mrb[0].mxu0
        %v487 = vpop.f32.mrb[0].mxu0
        %v488 = vadd.f32 %v393, %v487
        %v489 = vpop.f32.mrb[0].mxu0
        %490 = vdwg.mxu0
        %v491 = vmax.f32 %v477, 0.0
        %v492 = vmax.f32 %v480, 0.0
        %v493 = vmax.f32 %v485, 0.0
        %v494 = vmax.f32 %v488, 0.0
        %v495 = vpack.c.bf16 %v492, %v491
        %v496 = vpack.c.bf16 %v494, %v493
        %s497 = scalar_lea.vmem [#allocation2], 128
        %v498 = vld [vmem:[%s497] sm:$0xf]
        %v499 = vld [vmem:[%s497 + $0x4] sm:$0xf]
        %v500 = vld [vmem:[%s497 + $0x8] sm:$0xf]
        %v501 = vld [vmem:[%s497 + $0xc] sm:$0xf]
        %v502 = vld [vmem:[%s497 + $0x10] sm:$0xf]
        %v503 = vld [vmem:[%s497 + $0x14] sm:$0xf]
        %v504 = vld [vmem:[%s497 + $0x18] sm:$0xf]
        %v505 = vld [vmem:[%s497 + $0x1c] sm:$0xf]
        %v506 = vld [vmem:[%s497 + $0x20] sm:$0xf]
        %v507 = vld [vmem:[%s497 + $0x24] sm:$0xf]
        %v508 = vld [vmem:[%s497 + $0x28] sm:$0xf]
        %v509 = vld [vmem:[%s497 + $0x2c] sm:$0xf]
        %v510 = vld [vmem:[%s497 + $0x30] sm:$0xf]
        %v511 = vld [vmem:[%s497 + $0x34] sm:$0xf]
        %v512 = vld [vmem:[%s497 + $0x38] sm:$0xf]
        %v513 = vld [vmem:[%s497 + $0x3c] sm:$0xf]
        %v514 = vld [vmem:[%s3 + $0x2] sm:$0x1]
        %v515 = vlaneseq
        %v516 = vshrl.u32 %v515, 7
        %v517 = vsub.s32 0, %v516
        %v518 = vrot.slane %v514, %v517
        %v535 = vunpack.c.l.b16 %v498
        %v536 = vunpack.c.l.b16 %v499
        %v537 = vunpack.c.l.b16 %v500
        %v538 = vunpack.c.l.b16 %v501
        %v539 = vunpack.c.l.b16 %v502
        %v540 = vunpack.c.l.b16 %v503
        %v541 = vunpack.c.l.b16 %v504
        %v542 = vunpack.c.l.b16 %v505
        %v543 = vunpack.c.l.b16 %v506
        %v544 = vunpack.c.l.b16 %v507
        %v545 = vunpack.c.l.b16 %v508
        %v546 = vunpack.c.l.b16 %v509
        %v547 = vunpack.c.l.b16 %v510
        %v548 = vunpack.c.l.b16 %v511
        %v549 = vunpack.c.l.b16 %v512
        %v550 = vunpack.c.l.b16 %v513
        %v551 = vpack.c.b16 %v536, %v535
        %v552 = vpack.c.b16 %v538, %v537
        %v553 = vpack.c.b16 %v540, %v539
        %v554 = vpack.c.b16 %v542, %v541
        %v555 = vpack.c.b16 %v544, %v543
        %v556 = vpack.c.b16 %v546, %v545
        %v557 = vpack.c.b16 %v548, %v547
        %v558 = vpack.c.b16 %v550, %v549
        %567 = vmatprep.subr.bf16.mxu0 0
        %568 = vmatpush1.bf16.msra.mxu0 %v551
        %569 = vmatprep.subr.bf16.mxu0 0
        %570 = vmatpush1.bf16.msra.mxu0 %v552
        %571 = vmatprep.subr.bf16.mxu0 0
        %572 = vmatpush1.bf16.msra.mxu0 %v553
        %573 = vmatprep.subr.bf16.mxu0 0
        %574 = vmatpush1.bf16.msra.mxu0 %v554
        %575 = vmatprep.subr.bf16.mxu0 0
        %576 = vmatpush1.bf16.msra.mxu0 %v555
        %577 = vmatprep.subr.bf16.mxu0 0
        %578 = vmatpush1.bf16.msra.mxu0 %v556
        %579 = vmatprep.subr.bf16.mxu0 0
        %580 = vmatpush1.bf16.msra.mxu0 %v557
        %581 = vmatprep.subr.bf16.mxu0 0
        %582 = vmatpush1.bf16.msra.mxu0 %v558
        %583 = vmatprep.subr.bf16.mxu0 0
        %584 = vmatpush1.bf16.msra.mxu0 0
        %585 = vmatprep.subr.bf16.mxu0 0
        %586 = vmatpush1.bf16.msra.mxu0 0
        %587 = vmatprep.subr.bf16.mxu0 0
        %588 = vmatpush1.bf16.msra.mxu0 0
        %589 = vmatprep.subr.bf16.mxu0 0
        %590 = vmatpush1.bf16.msra.mxu0 0
        %591 = vmatprep.subr.bf16.mxu0 0
        %592 = vmatpush1.bf16.msra.mxu0 0
        %593 = vmatprep.subr.bf16.mxu0 0
        %594 = vmatpush1.bf16.msra.mxu0 0
        %595 = vmatprep.subr.bf16.mxu0 0
        %596 = vmatpush1.bf16.msra.mxu0 0
        %597 = vmatprep.subr.bf16.mxu0 0
        %598 = vmatpush1.bf16.msra.mxu0 0
        %599 = vmatprep.mubr.bf16.mxu0 0
        %600 = vmatmul.mubr.bf16.gmra.mrb[0].mxu0 %v495
        %v601 = vpop.f32.mrb[0].mxu0
        %v602 = vadd.f32 %v518, %v601
        %v603 = vpop.f32.mrb[0].mxu0
        %v604 = vpop.f32.mrb[0].mxu0
        %v605 = vadd.f32 %v518, %v604
        %v606 = vpop.f32.mrb[0].mxu0
        %607 = vmatprep.mubr.bf16.mxu0 0
        %608 = vmatmul.mubr.bf16.gmra.mrb[0].mxu0 %v496
        %v609 = vpop.f32.mrb[0].mxu0
        %v610 = vadd.f32 %v518, %v609
        %v611 = vpop.f32.mrb[0].mxu0
        %v612 = vpop.f32.mrb[0].mxu0
        %v613 = vadd.f32 %v518, %v612
        %v614 = vpop.f32.mrb[0].mxu0
        %615 = vdwg.mxu0
        %v616 = vmax.f32 %v602, 0.0
        %v617 = vmax.f32 %v605, 0.0
        %v618 = vmax.f32 %v610, 0.0
        %v619 = vmax.f32 %v613, 0.0
        %v620 = vpack.c.bf16 %v617, %v616
        %v621 = vpack.c.bf16 %v619, %v618
        %s622 = scalar_lea.vmem [#allocation2], 192
        %v623 = vld [vmem:[%s622] sm:$0xf]
        %v624 = vld [vmem:[%s622 + $0x4] sm:$0xf]
        %v625 = vld [vmem:[%s622 + $0x8] sm:$0xf]
        %v626 = vld [vmem:[%s622 + $0xc] sm:$0xf]
        %v627 = vld [vmem:[%s622 + $0x10] sm:$0xf]
        %v628 = vld [vmem:[%s622 + $0x14] sm:$0xf]
        %v629 = vld [vmem:[%s622 + $0x18] sm:$0xf]
        %v630 = vld [vmem:[%s622 + $0x1c] sm:$0xf]
        %v631 = vld [vmem:[%s622 + $0x20] sm:$0xf]
        %v632 = vld [vmem:[%s622 + $0x24] sm:$0xf]
        %v633 = vld [vmem:[%s622 + $0x28] sm:$0xf]
        %v634 = vld [vmem:[%s622 + $0x2c] sm:$0xf]
        %v635 = vld [vmem:[%s622 + $0x30] sm:$0xf]
        %v636 = vld [vmem:[%s622 + $0x34] sm:$0xf]
        %v637 = vld [vmem:[%s622 + $0x38] sm:$0xf]
        %v638 = vld [vmem:[%s622 + $0x3c] sm:$0xf]
        %v639 = vld [vmem:[%s3 + $0x3] sm:$0x1]
        %v640 = vlaneseq
        %v641 = vshrl.u32 %v640, 7
        %v642 = vsub.s32 0, %v641
        %v643 = vrot.slane %v639, %v642
        %v660 = vunpack.c.l.b16 %v623
        %v661 = vunpack.c.l.b16 %v624
        %v662 = vunpack.c.l.b16 %v625
        %v663 = vunpack.c.l.b16 %v626
        %v664 = vunpack.c.l.b16 %v627
        %v665 = vunpack.c.l.b16 %v628
        %v666 = vunpack.c.l.b16 %v629
        %v667 = vunpack.c.l.b16 %v630
        %v668 = vunpack.c.l.b16 %v631
        %v669 = vunpack.c.l.b16 %v632
        %v670 = vunpack.c.l.b16 %v633
        %v671 = vunpack.c.l.b16 %v634
        %v672 = vunpack.c.l.b16 %v635
        %v673 = vunpack.c.l.b16 %v636
        %v674 = vunpack.c.l.b16 %v637
        %v675 = vunpack.c.l.b16 %v638
        %v676 = vpack.c.b16 %v661, %v660
        %v677 = vpack.c.b16 %v663, %v662
        %v678 = vpack.c.b16 %v665, %v664
        %v679 = vpack.c.b16 %v667, %v666
        %v680 = vpack.c.b16 %v669, %v668
        %v681 = vpack.c.b16 %v671, %v670
        %v682 = vpack.c.b16 %v673, %v672
        %v683 = vpack.c.b16 %v675, %v674
        %692 = vmatprep.subr.bf16.mxu0 0
        %693 = vmatpush1.bf16.msra.mxu0 %v676
        %694 = vmatprep.subr.bf16.mxu0 0
        %695 = vmatpush1.bf16.msra.mxu0 %v677
        %696 = vmatprep.subr.bf16.mxu0 0
        %697 = vmatpush1.bf16.msra.mxu0 %v678
        %698 = vmatprep.subr.bf16.mxu0 0
        %699 = vmatpush1.bf16.msra.mxu0 %v679
        %700 = vmatprep.subr.bf16.mxu0 0
        %701 = vmatpush1.bf16.msra.mxu0 %v680
        %702 = vmatprep.subr.bf16.mxu0 0
        %703 = vmatpush1.bf16.msra.mxu0 %v681
        %704 = vmatprep.subr.bf16.mxu0 0
        %705 = vmatpush1.bf16.msra.mxu0 %v682
        %706 = vmatprep.subr.bf16.mxu0 0
        %707 = vmatpush1.bf16.msra.mxu0 %v683
        %708 = vmatprep.subr.bf16.mxu0 0
        %709 = vmatpush1.bf16.msra.mxu0 0
        %710 = vmatprep.subr.bf16.mxu0 0
        %711 = vmatpush1.bf16.msra.mxu0 0
        %712 = vmatprep.subr.bf16.mxu0 0
        %713 = vmatpush1.bf16.msra.mxu0 0
        %714 = vmatprep.subr.bf16.mxu0 0
        %715 = vmatpush1.bf16.msra.mxu0 0
        %716 = vmatprep.subr.bf16.mxu0 0
        %717 = vmatpush1.bf16.msra.mxu0 0
        %718 = vmatprep.subr.bf16.mxu0 0
        %719 = vmatpush1.bf16.msra.mxu0 0
        %720 = vmatprep.subr.bf16.mxu0 0
        %721 = vmatpush1.bf16.msra.mxu0 0
        %722 = vmatprep.subr.bf16.mxu0 0
        %723 = vmatpush1.bf16.msra.mxu0 0
        %724 = vmatprep.mubr.bf16.mxu0 0
        %725 = vmatmul.mubr.bf16.gmra.mrb[0].mxu0 %v620
        %v726 = vpop.f32.mrb[0].mxu0
        %v727 = vadd.f32 %v643, %v726
        %v728 = vpop.f32.mrb[0].mxu0
        %v729 = vpop.f32.mrb[0].mxu0
        %v730 = vadd.f32 %v643, %v729
        %v731 = vpop.f32.mrb[0].mxu0
        %732 = vmatprep.mubr.bf16.mxu0 0
        %733 = vmatmul.mubr.bf16.gmra.mrb[0].mxu0 %v621
        %v734 = vpop.f32.mrb[0].mxu0
        %v735 = vadd.f32 %v643, %v734
        %v736 = vpop.f32.mrb[0].mxu0
        %v737 = vpop.f32.mrb[0].mxu0
        %v738 = vadd.f32 %v643, %v737
        %v739 = vpop.f32.mrb[0].mxu0
        %740 = vdwg.mxu0
        %v741 = vmax.f32 %v727, 0.0
        %v742 = vmax.f32 %v730, 0.0
        %v743 = vmax.f32 %v735, 0.0
        %v744 = vmax.f32 %v738, 0.0
        %v745 = vpack.c.bf16 %v742, %v741
        %v746 = vpack.c.bf16 %v744, %v743
        %s747 = scalar_lea.vmem [#allocation2], 256
        %v748 = vld [vmem:[%s747] sm:$0xf]
        %v749 = vld [vmem:[%s747 + $0x4] sm:$0xf]
        %v750 = vld [vmem:[%s747 + $0x8] sm:$0xf]
        %v751 = vld [vmem:[%s747 + $0xc] sm:$0xf]
        %v752 = vld [vmem:[%s747 + $0x10] sm:$0xf]
        %v753 = vld [vmem:[%s747 + $0x14] sm:$0xf]
        %v754 = vld [vmem:[%s747 + $0x18] sm:$0xf]
        %v755 = vld [vmem:[%s747 + $0x1c] sm:$0xf]
        %v756 = vld [vmem:[%s747 + $0x20] sm:$0xf]
        %v757 = vld [vmem:[%s747 + $0x24] sm:$0xf]
        %v758 = vld [vmem:[%s747 + $0x28] sm:$0xf]
        %v759 = vld [vmem:[%s747 + $0x2c] sm:$0xf]
        %v760 = vld [vmem:[%s747 + $0x30] sm:$0xf]
        %v761 = vld [vmem:[%s747 + $0x34] sm:$0xf]
        %v762 = vld [vmem:[%s747 + $0x38] sm:$0xf]
        %v763 = vld [vmem:[%s747 + $0x3c] sm:$0xf]
        %v764 = vld [vmem:[%s3 + $0x4] sm:$0x1]
        %v765 = vlaneseq
        %v766 = vshrl.u32 %v765, 7
        %v767 = vsub.s32 0, %v766
        %v768 = vrot.slane %v764, %v767
        %v785 = vunpack.c.l.b16 %v748
        %v786 = vunpack.c.l.b16 %v749
        %v787 = vunpack.c.l.b16 %v750
        %v788 = vunpack.c.l.b16 %v751
        %v789 = vunpack.c.l.b16 %v752
        %v790 = vunpack.c.l.b16 %v753
        %v791 = vunpack.c.l.b16 %v754
        %v792 = vunpack.c.l.b16 %v755
        %v793 = vunpack.c.l.b16 %v756
        %v794 = vunpack.c.l.b16 %v757
        %v795 = vunpack.c.l.b16 %v758
        %v796 = vunpack.c.l.b16 %v759
        %v797 = vunpack.c.l.b16 %v760
        %v798 = vunpack.c.l.b16 %v761
        %v799 = vunpack.c.l.b16 %v762
        %v800 = vunpack.c.l.b16 %v763
        %v801 = vpack.c.b16 %v786, %v785
        %v802 = vpack.c.b16 %v788, %v787
        %v803 = vpack.c.b16 %v790, %v789
        %v804 = vpack.c.b16 %v792, %v791
        %v805 = vpack.c.b16 %v794, %v793
        %v806 = vpack.c.b16 %v796, %v795
        %v807 = vpack.c.b16 %v798, %v797
        %v808 = vpack.c.b16 %v800, %v799
        %817 = vmatprep.subr.bf16.mxu0 0
        %818 = vmatpush1.bf16.msra.mxu0 %v801
        %819 = vmatprep.subr.bf16.mxu0 0
        %820 = vmatpush1.bf16.msra.mxu0 %v802
        %821 = vmatprep.subr.bf16.mxu0 0
        %822 = vmatpush1.bf16.msra.mxu0 %v803
        %823 = vmatprep.subr.bf16.mxu0 0
        %824 = vmatpush1.bf16.msra.mxu0 %v804
        %825 = vmatprep.subr.bf16.mxu0 0
        %826 = vmatpush1.bf16.msra.mxu0 %v805
        %827 = vmatprep.subr.bf16.mxu0 0
        %828 = vmatpush1.bf16.msra.mxu0 %v806
        %829 = vmatprep.subr.bf16.mxu0 0
        %830 = vmatpush1.bf16.msra.mxu0 %v807
        %831 = vmatprep.subr.bf16.mxu0 0
        %832 = vmatpush1.bf16.msra.mxu0 %v808
        %833 = vmatprep.subr.bf16.mxu0 0
        %834 = vmatpush1.bf16.msra.mxu0 0
        %835 = vmatprep.subr.bf16.mxu0 0
        %836 = vmatpush1.bf16.msra.mxu0 0
        %837 = vmatprep.subr.bf16.mxu0 0
        %838 = vmatpush1.bf16.msra.mxu0 0
        %839 = vmatprep.subr.bf16.mxu0 0
        %840 = vmatpush1.bf16.msra.mxu0 0
        %841 = vmatprep.subr.bf16.mxu0 0
        %842 = vmatpush1.bf16.msra.mxu0 0
        %843 = vmatprep.subr.bf16.mxu0 0
        %844 = vmatpush1.bf16.msra.mxu0 0
        %845 = vmatprep.subr.bf16.mxu0 0
        %846 = vmatpush1.bf16.msra.mxu0 0
        %847 = vmatprep.subr.bf16.mxu0 0
        %848 = vmatpush1.bf16.msra.mxu0 0
        %849 = vmatprep.mubr.bf16.mxu0 0
        %850 = vmatmul.mubr.bf16.gmra.mrb[0].mxu0 %v745
        %v851 = vpop.f32.mrb[0].mxu0
        %v852 = vadd.f32 %v768, %v851
        %v853 = vpop.f32.mrb[0].mxu0
        %v854 = vpop.f32.mrb[0].mxu0
        %v855 = vadd.f32 %v768, %v854
        %v856 = vpop.f32.mrb[0].mxu0
        %857 = vmatprep.mubr.bf16.mxu0 0
        %858 = vmatmul.mubr.bf16.gmra.mrb[0].mxu0 %v746
        %v859 = vpop.f32.mrb[0].mxu0
        %v860 = vadd.f32 %v768, %v859
        %v861 = vpop.f32.mrb[0].mxu0
        %v862 = vpop.f32.mrb[0].mxu0
        %v863 = vadd.f32 %v768, %v862
        %v864 = vpop.f32.mrb[0].mxu0
        %865 = vdwg.mxu0
        %v866 = vld [vmem:[%s233] sm:$0xff]
        %v867 = vld [vmem:[%s233 + $0x8] sm:$0xff]
        %v868 = vld [vmem:[%s233 + $0x10] sm:$0xff]
        %v869 = vld [vmem:[%s233 + $0x18] sm:$0xff]
        %v870 = vmul.f32 %v852, 0.5
        %v871 = vmul.f32 %v855, 0.5
        %v872 = vmul.f32 %v860, 0.5
        %v873 = vmul.f32 %v863, 0.5
        %v874 = vmul.f32 %v870, 1.442695
        %v875 = vpow.pop %v874
        %v876 = vmul.f32 %v871, 1.442695
        %v877 = vpow.pop %v876
        %v878 = vmul.f32 %v872, 1.442695
        %v879 = vpow.pop %v878
        %v880 = vmul.f32 %v873, 1.442695
        %v881 = vpow.pop %v880
        %886 = vrot.lane.b32.xlu0 %v875, 22
        %v887 = vpop.permute.xlu0 %886
        %888 = vrot.lane.b32.xlu0 %v877, 22
        %v889 = vpop.permute.xlu0 %888
        %890 = vrot.lane.b32.xlu0 %v879, 22
        %v891 = vpop.permute.xlu0 %890
        %892 = vrot.lane.b32.xlu0 %v881, 22
        %v893 = vpop.permute.xlu0 %892
        %v898 = vmul.f32 %v866, %v887
        %v899 = vmul.f32 %v867, %v889
        %v900 = vmul.f32 %v868, %v891
        %v901 = vmul.f32 %v869, %v893
        %906 = vrot.lane.b32.xlu0 %v898, 96
        %v907 = vpop.permute.xlu0 %906
        %908 = vrot.lane.b32.xlu0 %v899, 96
        %v909 = vpop.permute.xlu0 %908
        %910 = vrot.lane.b32.xlu0 %v900, 96
        %v911 = vpop.permute.xlu0 %910
        %912 = vrot.lane.b32.xlu0 %v901, 96
        %v913 = vpop.permute.xlu0 %912
        %v918 = vadd.f32 %v852, %v907
        %v919 = vadd.f32 %v855, %v909
        %v920 = vadd.f32 %v860, %v911
        %v921 = vadd.f32 %v863, %v913
        %926 = vrot.lane.b32.xlu0 %v918, 32
        %v927 = vpop.permute.xlu0 %926
        %928 = vrot.lane.b32.xlu0 %v919, 32
        %v929 = vpop.permute.xlu0 %928
        %930 = vrot.lane.b32.xlu0 %v920, 32
        %v931 = vpop.permute.xlu0 %930
        %932 = vrot.lane.b32.xlu0 %v921, 32
        %v933 = vpop.permute.xlu0 %932
        %vm938 = vcmask 80896
        %v939 = vsel %vm938, %v927, 0.0
        %v940 = vsel %vm938, %v929, 0.0
        %v941 = vsel %vm938, %v931, 0.0
        %v942 = vsel %vm938, %v933, 0.0
        %v943 = vpack.c.bf16 %v940, %v939
        %v944 = vpack.c.bf16 %v942, %v941
        %s945 = scalar_lea.vmem [#allocation2], 320
        %v946 = vld [vmem:[%s945] sm:$0xf]
        %v947 = vld [vmem:[%s945 + $0x4] sm:$0xf]
        %v948 = vld [vmem:[%s945 + $0x8] sm:$0xf]
        %v949 = vld [vmem:[%s945 + $0xc] sm:$0xf]
        %v950 = vld [vmem:[%s945 + $0x10] sm:$0xf]
        %v951 = vld [vmem:[%s945 + $0x14] sm:$0xf]
        %v952 = vld [vmem:[%s945 + $0x18] sm:$0xf]
        %v953 = vld [vmem:[%s945 + $0x1c] sm:$0xf]
        %v954 = vld [vmem:[%s945 + $0x20] sm:$0xf]
        %v955 = vld [vmem:[%s945 + $0x24] sm:$0xf]
        %v956 = vld [vmem:[%s945 + $0x28] sm:$0xf]
        %v957 = vld [vmem:[%s945 + $0x2c] sm:$0xf]
        %v958 = vld [vmem:[%s945 + $0x30] sm:$0xf]
        %v959 = vld [vmem:[%s945 + $0x34] sm:$0xf]
        %v960 = vld [vmem:[%s945 + $0x38] sm:$0xf]
        %v961 = vld [vmem:[%s945 + $0x3c] sm:$0xf]
        %v962 = vld [vmem:[%s3 + $0x5] sm:$0x1]
        %v963 = vlaneseq
        %v964 = vshrl.u32 %v963, 7
        %v965 = vsub.s32 0, %v964
        %v966 = vrot.slane %v962, %v965
        %v983 = vunpack.c.l.b16 %v946
        %v984 = vunpack.c.l.b16 %v947
        %v985 = vunpack.c.l.b16 %v948
        %v986 = vunpack.c.l.b16 %v949
        %v987 = vunpack.c.l.b16 %v950
        %v988 = vunpack.c.l.b16 %v951
        %v989 = vunpack.c.l.b16 %v952
        %v990 = vunpack.c.l.b16 %v953
        %v991 = vunpack.c.l.b16 %v954
        %v992 = vunpack.c.l.b16 %v955
        %v993 = vunpack.c.l.b16 %v956
        %v994 = vunpack.c.l.b16 %v957
        %v995 = vunpack.c.l.b16 %v958
        %v996 = vunpack.c.l.b16 %v959
        %v997 = vunpack.c.l.b16 %v960
        %v998 = vunpack.c.l.b16 %v961
        %v999 = vpack.c.b16 %v984, %v983
        %v1000 = vpack.c.b16 %v986, %v985
        %v1001 = vpack.c.b16 %v988, %v987
        %v1002 = vpack.c.b16 %v990, %v989
        %v1003 = vpack.c.b16 %v992, %v991
        %v1004 = vpack.c.b16 %v994, %v993
        %v1005 = vpack.c.b16 %v996, %v995
        %v1006 = vpack.c.b16 %v998, %v997
        %1015 = vmatprep.subr.bf16.mxu0 0
        %1016 = vmatpush1.bf16.msra.mxu0 %v999
        %1017 = vmatprep.subr.bf16.mxu0 0
        %1018 = vmatpush1.bf16.msra.mxu0 %v1000
        %1019 = vmatprep.subr.bf16.mxu0 0
        %1020 = vmatpush1.bf16.msra.mxu0 %v1001
        %1021 = vmatprep.subr.bf16.mxu0 0
        %1022 = vmatpush1.bf16.msra.mxu0 %v1002
        %1023 = vmatprep.subr.bf16.mxu0 0
        %1024 = vmatpush1.bf16.msra.mxu0 %v1003
        %1025 = vmatprep.subr.bf16.mxu0 0
        %1026 = vmatpush1.bf16.msra.mxu0 %v1004
        %1027 = vmatprep.subr.bf16.mxu0 0
        %1028 = vmatpush1.bf16.msra.mxu0 %v1005
        %1029 = vmatprep.subr.bf16.mxu0 0
        %1030 = vmatpush1.bf16.msra.mxu0 %v1006
        %1031 = vmatprep.subr.bf16.mxu0 0
        %1032 = vmatpush1.bf16.msra.mxu0 0
        %1033 = vmatprep.subr.bf16.mxu0 0
        %1034 = vmatpush1.bf16.msra.mxu0 0
        %1035 = vmatprep.subr.bf16.mxu0 0
        %1036 = vmatpush1.bf16.msra.mxu0 0
        %1037 = vmatprep.subr.bf16.mxu0 0
        %1038 = vmatpush1.bf16.msra.mxu0 0
        %1039 = vmatprep.subr.bf16.mxu0 0
        %1040 = vmatpush1.bf16.msra.mxu0 0
        %1041 = vmatprep.subr.bf16.mxu0 0
        %1042 = vmatpush1.bf16.msra.mxu0 0
        %1043 = vmatprep.subr.bf16.mxu0 0
        %1044 = vmatpush1.bf16.msra.mxu0 0
        %1045 = vmatprep.subr.bf16.mxu0 0
        %1046 = vmatpush1.bf16.msra.mxu0 0
        %1047 = vmatprep.mubr.bf16.mxu0 0
        %1048 = vmatmul.mubr.bf16.gmra.mrb[0].mxu0 %v943
        %v1049 = vpop.f32.mrb[0].mxu0
        %v1050 = vadd.f32 %v966, %v1049
        %v1051 = vpop.f32.mrb[0].mxu0
        %v1052 = vpop.f32.mrb[0].mxu0
        %v1053 = vadd.f32 %v966, %v1052
        %v1054 = vpop.f32.mrb[0].mxu0
        %1055 = vmatprep.mubr.bf16.mxu0 0
        %1056 = vmatmul.mubr.bf16.gmra.mrb[0].mxu0 %v944
        %v1057 = vpop.f32.mrb[0].mxu0
        %v1058 = vadd.f32 %v966, %v1057
        %v1059 = vpop.f32.mrb[0].mxu0
        %v1060 = vpop.f32.mrb[0].mxu0
        %v1061 = vadd.f32 %v966, %v1060
        %v1062 = vpop.f32.mrb[0].mxu0
        %1063 = vdwg.mxu0
        %v1064 = vmax.f32 %v1050, 0.0
        %v1065 = vmax.f32 %v1053, 0.0
        %v1066 = vmax.f32 %v1058, 0.0
        %v1067 = vmax.f32 %v1061, 0.0
        %v1068 = vpack.c.bf16 %v1065, %v1064
        %v1069 = vpack.c.bf16 %v1067, %v1066
        %s1070 = scalar_lea.vmem [#allocation2], 384
        %v1071 = vld [vmem:[%s1070] sm:$0xf]
        %v1072 = vld [vmem:[%s1070 + $0x4] sm:$0xf]
        %v1073 = vld [vmem:[%s1070 + $0x8] sm:$0xf]
        %v1074 = vld [vmem:[%s1070 + $0xc] sm:$0xf]
        %v1075 = vld [vmem:[%s1070 + $0x10] sm:$0xf]
        %v1076 = vld [vmem:[%s1070 + $0x14] sm:$0xf]
        %v1077 = vld [vmem:[%s1070 + $0x18] sm:$0xf]
        %v1078 = vld [vmem:[%s1070 + $0x1c] sm:$0xf]
        %v1079 = vld [vmem:[%s1070 + $0x20] sm:$0xf]
        %v1080 = vld [vmem:[%s1070 + $0x24] sm:$0xf]
        %v1081 = vld [vmem:[%s1070 + $0x28] sm:$0xf]
        %v1082 = vld [vmem:[%s1070 + $0x2c] sm:$0xf]
        %v1083 = vld [vmem:[%s1070 + $0x30] sm:$0xf]
        %v1084 = vld [vmem:[%s1070 + $0x34] sm:$0xf]
        %v1085 = vld [vmem:[%s1070 + $0x38] sm:$0xf]
        %v1086 = vld [vmem:[%s1070 + $0x3c] sm:$0xf]
        %v1087 = vld [vmem:[%s3 + $0x6] sm:$0x1]
        %v1088 = vlaneseq
        %v1089 = vshrl.u32 %v1088, 7
        %v1090 = vsub.s32 0, %v1089
        %v1091 = vrot.slane %v1087, %v1090
        %v1108 = vunpack.c.l.b16 %v1071
        %v1109 = vunpack.c.l.b16 %v1072
        %v1110 = vunpack.c.l.b16 %v1073
        %v1111 = vunpack.c.l.b16 %v1074
        %v1112 = vunpack.c.l.b16 %v1075
        %v1113 = vunpack.c.l.b16 %v1076
        %v1114 = vunpack.c.l.b16 %v1077
        %v1115 = vunpack.c.l.b16 %v1078
        %v1116 = vunpack.c.l.b16 %v1079
        %v1117 = vunpack.c.l.b16 %v1080
        %v1118 = vunpack.c.l.b16 %v1081
        %v1119 = vunpack.c.l.b16 %v1082
        %v1120 = vunpack.c.l.b16 %v1083
        %v1121 = vunpack.c.l.b16 %v1084
        %v1122 = vunpack.c.l.b16 %v1085
        %v1123 = vunpack.c.l.b16 %v1086
        %v1124 = vpack.c.b16 %v1109, %v1108
        %v1125 = vpack.c.b16 %v1111, %v1110
        %v1126 = vpack.c.b16 %v1113, %v1112
        %v1127 = vpack.c.b16 %v1115, %v1114
        %v1128 = vpack.c.b16 %v1117, %v1116
        %v1129 = vpack.c.b16 %v1119, %v1118
        %v1130 = vpack.c.b16 %v1121, %v1120
        %v1131 = vpack.c.b16 %v1123, %v1122
        %1140 = vmatprep.subr.bf16.mxu0 0
        %1141 = vmatpush1.bf16.msra.mxu0 %v1124
        %1142 = vmatprep.subr.bf16.mxu0 0
        %1143 = vmatpush1.bf16.msra.mxu0 %v1125
        %1144 = vmatprep.subr.bf16.mxu0 0
        %1145 = vmatpush1.bf16.msra.mxu0 %v1126
        %1146 = vmatprep.subr.bf16.mxu0 0
        %1147 = vmatpush1.bf16.msra.mxu0 %v1127
        %1148 = vmatprep.subr.bf16.mxu0 0
        %1149 = vmatpush1.bf16.msra.mxu0 %v1128
        %1150 = vmatprep.subr.bf16.mxu0 0
        %1151 = vmatpush1.bf16.msra.mxu0 %v1129
        %1152 = vmatprep.subr.bf16.mxu0 0
        %1153 = vmatpush1.bf16.msra.mxu0 %v1130
        %1154 = vmatprep.subr.bf16.mxu0 0
        %1155 = vmatpush1.bf16.msra.mxu0 %v1131
        %1156 = vmatprep.subr.bf16.mxu0 0
        %1157 = vmatpush1.bf16.msra.mxu0 0
        %1158 = vmatprep.subr.bf16.mxu0 0
        %1159 = vmatpush1.bf16.msra.mxu0 0
        %1160 = vmatprep.subr.bf16.mxu0 0
        %1161 = vmatpush1.bf16.msra.mxu0 0
        %1162 = vmatprep.subr.bf16.mxu0 0
        %1163 = vmatpush1.bf16.msra.mxu0 0
        %1164 = vmatprep.subr.bf16.mxu0 0
        %1165 = vmatpush1.bf16.msra.mxu0 0
        %1166 = vmatprep.subr.bf16.mxu0 0
        %1167 = vmatpush1.bf16.msra.mxu0 0
        %1168 = vmatprep.subr.bf16.mxu0 0
        %1169 = vmatpush1.bf16.msra.mxu0 0
        %1170 = vmatprep.subr.bf16.mxu0 0
        %1171 = vmatpush1.bf16.msra.mxu0 0
        %1172 = vmatprep.mubr.bf16.mxu0 0
        %1173 = vmatmul.mubr.bf16.gmra.mrb[0].mxu0 %v1068
        %v1174 = vpop.f32.mrb[0].mxu0
        %v1175 = vadd.f32 %v1091, %v1174
        %v1176 = vpop.f32.mrb[0].mxu0
        %v1177 = vpop.f32.mrb[0].mxu0
        %v1178 = vadd.f32 %v1091, %v1177
        %v1179 = vpop.f32.mrb[0].mxu0
        %1180 = vmatprep.mubr.bf16.mxu0 0
        %1181 = vmatmul.mubr.bf16.gmra.mrb[0].mxu0 %v1069
        %v1182 = vpop.f32.mrb[0].mxu0
        %v1183 = vadd.f32 %v1091, %v1182
        %v1184 = vpop.f32.mrb[0].mxu0
        %v1185 = vpop.f32.mrb[0].mxu0
        %v1186 = vadd.f32 %v1091, %v1185
        %v1187 = vpop.f32.mrb[0].mxu0
        %1188 = vdwg.mxu0
        %v1189 = vmax.f32 %v1175, 0.0
        %v1190 = vmax.f32 %v1178, 0.0
        %v1191 = vmax.f32 %v1183, 0.0
        %v1192 = vmax.f32 %v1186, 0.0
        %v1193 = vpack.c.bf16 %v1190, %v1189
        %v1194 = vpack.c.bf16 %v1192, %v1191
        %s1195 = scalar_lea.vmem [#allocation2], 448
        %v1196 = vld [vmem:[%s1195] sm:$0xf]
        %v1197 = vld [vmem:[%s1195 + $0x4] sm:$0xf]
        %v1198 = vld [vmem:[%s1195 + $0x8] sm:$0xf]
        %v1199 = vld [vmem:[%s1195 + $0xc] sm:$0xf]
        %v1200 = vld [vmem:[%s1195 + $0x10] sm:$0xf]
        %v1201 = vld [vmem:[%s1195 + $0x14] sm:$0xf]
        %v1202 = vld [vmem:[%s1195 + $0x18] sm:$0xf]
        %v1203 = vld [vmem:[%s1195 + $0x1c] sm:$0xf]
        %v1204 = vld [vmem:[%s1195 + $0x20] sm:$0xf]
        %v1205 = vld [vmem:[%s1195 + $0x24] sm:$0xf]
        %v1206 = vld [vmem:[%s1195 + $0x28] sm:$0xf]
        %v1207 = vld [vmem:[%s1195 + $0x2c] sm:$0xf]
        %v1208 = vld [vmem:[%s1195 + $0x30] sm:$0xf]
        %v1209 = vld [vmem:[%s1195 + $0x34] sm:$0xf]
        %v1210 = vld [vmem:[%s1195 + $0x38] sm:$0xf]
        %v1211 = vld [vmem:[%s1195 + $0x3c] sm:$0xf]
        %v1212 = vld [vmem:[%s3 + $0x7] sm:$0x1]
        %v1213 = vlaneseq
        %v1214 = vshrl.u32 %v1213, 7
        %v1215 = vsub.s32 0, %v1214
        %v1216 = vrot.slane %v1212, %v1215
        %v1233 = vunpack.c.l.b16 %v1196
        %v1234 = vunpack.c.l.b16 %v1197
        %v1235 = vunpack.c.l.b16 %v1198
        %v1236 = vunpack.c.l.b16 %v1199
        %v1237 = vunpack.c.l.b16 %v1200
        %v1238 = vunpack.c.l.b16 %v1201
        %v1239 = vunpack.c.l.b16 %v1202
        %v1240 = vunpack.c.l.b16 %v1203
        %v1241 = vunpack.c.l.b16 %v1204
        %v1242 = vunpack.c.l.b16 %v1205
        %v1243 = vunpack.c.l.b16 %v1206
        %v1244 = vunpack.c.l.b16 %v1207
        %v1245 = vunpack.c.l.b16 %v1208
        %v1246 = vunpack.c.l.b16 %v1209
        %v1247 = vunpack.c.l.b16 %v1210
        %v1248 = vunpack.c.l.b16 %v1211
        %v1249 = vpack.c.b16 %v1234, %v1233
        %v1250 = vpack.c.b16 %v1236, %v1235
        %v1251 = vpack.c.b16 %v1238, %v1237
        %v1252 = vpack.c.b16 %v1240, %v1239
        %v1253 = vpack.c.b16 %v1242, %v1241
        %v1254 = vpack.c.b16 %v1244, %v1243
        %v1255 = vpack.c.b16 %v1246, %v1245
        %v1256 = vpack.c.b16 %v1248, %v1247
        %1265 = vmatprep.subr.bf16.mxu0 0
        %1266 = vmatpush1.bf16.msra.mxu0 %v1249
        %1267 = vmatprep.subr.bf16.mxu0 0
        %1268 = vmatpush1.bf16.msra.mxu0 %v1250
        %1269 = vmatprep.subr.bf16.mxu0 0
        %1270 = vmatpush1.bf16.msra.mxu0 %v1251
        %1271 = vmatprep.subr.bf16.mxu0 0
        %1272 = vmatpush1.bf16.msra.mxu0 %v1252
        %1273 = vmatprep.subr.bf16.mxu0 0
        %1274 = vmatpush1.bf16.msra.mxu0 %v1253
        %1275 = vmatprep.subr.bf16.mxu0 0
        %1276 = vmatpush1.bf16.msra.mxu0 %v1254
        %1277 = vmatprep.subr.bf16.mxu0 0
        %1278 = vmatpush1.bf16.msra.mxu0 %v1255
        %1279 = vmatprep.subr.bf16.mxu0 0
        %1280 = vmatpush1.bf16.msra.mxu0 %v1256
        %1281 = vmatprep.subr.bf16.mxu0 0
        %1282 = vmatpush1.bf16.msra.mxu0 0
        %1283 = vmatprep.subr.bf16.mxu0 0
        %1284 = vmatpush1.bf16.msra.mxu0 0
        %1285 = vmatprep.subr.bf16.mxu0 0
        %1286 = vmatpush1.bf16.msra.mxu0 0
        %1287 = vmatprep.subr.bf16.mxu0 0
        %1288 = vmatpush1.bf16.msra.mxu0 0
        %1289 = vmatprep.subr.bf16.mxu0 0
        %1290 = vmatpush1.bf16.msra.mxu0 0
        %1291 = vmatprep.subr.bf16.mxu0 0
        %1292 = vmatpush1.bf16.msra.mxu0 0
        %1293 = vmatprep.subr.bf16.mxu0 0
        %1294 = vmatpush1.bf16.msra.mxu0 0
        %1295 = vmatprep.subr.bf16.mxu0 0
        %1296 = vmatpush1.bf16.msra.mxu0 0
        %1297 = vmatprep.mubr.bf16.mxu0 0
        %1298 = vmatmul.mubr.bf16.gmra.mrb[0].mxu0 %v1193
        %v1299 = vpop.f32.mrb[0].mxu0
        %v1300 = vadd.f32 %v1216, %v1299
        %v1301 = vpop.f32.mrb[0].mxu0
        %v1302 = vpop.f32.mrb[0].mxu0
        %v1303 = vadd.f32 %v1216, %v1302
        %v1304 = vpop.f32.mrb[0].mxu0
        %1305 = vmatprep.mubr.bf16.mxu0 0
        %1306 = vmatmul.mubr.bf16.gmra.mrb[0].mxu0 %v1194
        %v1307 = vpop.f32.mrb[0].mxu0
        %v1308 = vadd.f32 %v1216, %v1307
        %v1309 = vpop.f32.mrb[0].mxu0
        %v1310 = vpop.f32.mrb[0].mxu0
        %v1311 = vadd.f32 %v1216, %v1310
        %v1312 = vpop.f32.mrb[0].mxu0
        %1313 = vdwg.mxu0
        %v1314 = vmax.f32 %v1300, 0.0
        %v1315 = vmax.f32 %v1303, 0.0
        %v1316 = vmax.f32 %v1308, 0.0
        %v1317 = vmax.f32 %v1311, 0.0
        %v1318 = vpack.c.bf16 %v1315, %v1314
        %v1319 = vpack.c.bf16 %v1317, %v1316
        %s1320 = scalar_lea.vmem [#allocation2], 512
        %v1321 = vld [vmem:[%s1320] sm:$0xf]
        %v1322 = vld [vmem:[%s1320 + $0x4] sm:$0xf]
        %v1323 = vld [vmem:[%s1320 + $0x8] sm:$0xf]
        %v1324 = vld [vmem:[%s1320 + $0xc] sm:$0xf]
        %v1325 = vld [vmem:[%s1320 + $0x10] sm:$0xf]
        %v1326 = vld [vmem:[%s1320 + $0x14] sm:$0xf]
        %v1327 = vld [vmem:[%s1320 + $0x18] sm:$0xf]
        %v1328 = vld [vmem:[%s1320 + $0x1c] sm:$0xf]
        %v1329 = vld [vmem:[%s1320 + $0x20] sm:$0xf]
        %v1330 = vld [vmem:[%s1320 + $0x24] sm:$0xf]
        %v1331 = vld [vmem:[%s1320 + $0x28] sm:$0xf]
        %v1332 = vld [vmem:[%s1320 + $0x2c] sm:$0xf]
        %v1333 = vld [vmem:[%s1320 + $0x30] sm:$0xf]
        %v1334 = vld [vmem:[%s1320 + $0x34] sm:$0xf]
        %v1335 = vld [vmem:[%s1320 + $0x38] sm:$0xf]
        %v1336 = vld [vmem:[%s1320 + $0x3c] sm:$0xf]
        %v1337 = vld [vmem:[%s3 + $0x8] sm:$0x1]
        %v1338 = vlaneseq
        %v1339 = vshrl.u32 %v1338, 7
        %v1340 = vsub.s32 0, %v1339
        %v1341 = vrot.slane %v1337, %v1340
        %v1358 = vunpack.c.l.b16 %v1321
        %v1359 = vunpack.c.l.b16 %v1322
        %v1360 = vunpack.c.l.b16 %v1323
        %v1361 = vunpack.c.l.b16 %v1324
        %v1362 = vunpack.c.l.b16 %v1325
        %v1363 = vunpack.c.l.b16 %v1326
        %v1364 = vunpack.c.l.b16 %v1327
        %v1365 = vunpack.c.l.b16 %v1328
        %v1366 = vunpack.c.l.b16 %v1329
        %v1367 = vunpack.c.l.b16 %v1330
        %v1368 = vunpack.c.l.b16 %v1331
        %v1369 = vunpack.c.l.b16 %v1332
        %v1370 = vunpack.c.l.b16 %v1333
        %v1371 = vunpack.c.l.b16 %v1334
        %v1372 = vunpack.c.l.b16 %v1335
        %v1373 = vunpack.c.l.b16 %v1336
        %v1374 = vpack.c.b16 %v1359, %v1358
        %v1375 = vpack.c.b16 %v1361, %v1360
        %v1376 = vpack.c.b16 %v1363, %v1362
        %v1377 = vpack.c.b16 %v1365, %v1364
        %v1378 = vpack.c.b16 %v1367, %v1366
        %v1379 = vpack.c.b16 %v1369, %v1368
        %v1380 = vpack.c.b16 %v1371, %v1370
        %v1381 = vpack.c.b16 %v1373, %v1372
        %1390 = vmatprep.subr.bf16.mxu0 0
        %1391 = vmatpush1.bf16.msra.mxu0 %v1374
        %1392 = vmatprep.subr.bf16.mxu0 0
        %1393 = vmatpush1.bf16.msra.mxu0 %v1375
        %1394 = vmatprep.subr.bf16.mxu0 0
        %1395 = vmatpush1.bf16.msra.mxu0 %v1376
        %1396 = vmatprep.subr.bf16.mxu0 0
        %1397 = vmatpush1.bf16.msra.mxu0 %v1377
        %1398 = vmatprep.subr.bf16.mxu0 0
        %1399 = vmatpush1.bf16.msra.mxu0 %v1378
        %1400 = vmatprep.subr.bf16.mxu0 0
        %1401 = vmatpush1.bf16.msra.mxu0 %v1379
        %1402 = vmatprep.subr.bf16.mxu0 0
        %1403 = vmatpush1.bf16.msra.mxu0 %v1380
        %1404 = vmatprep.subr.bf16.mxu0 0
        %1405 = vmatpush1.bf16.msra.mxu0 %v1381
        %1406 = vmatprep.subr.bf16.mxu0 0
        %1407 = vmatpush1.bf16.msra.mxu0 0
        %1408 = vmatprep.subr.bf16.mxu0 0
        %1409 = vmatpush1.bf16.msra.mxu0 0
        %1410 = vmatprep.subr.bf16.mxu0 0
        %1411 = vmatpush1.bf16.msra.mxu0 0
        %1412 = vmatprep.subr.bf16.mxu0 0
        %1413 = vmatpush1.bf16.msra.mxu0 0
        %1414 = vmatprep.subr.bf16.mxu0 0
        %1415 = vmatpush1.bf16.msra.mxu0 0
        %1416 = vmatprep.subr.bf16.mxu0 0
        %1417 = vmatpush1.bf16.msra.mxu0 0
        %1418 = vmatprep.subr.bf16.mxu0 0
        %1419 = vmatpush1.bf16.msra.mxu0 0
        %1420 = vmatprep.subr.bf16.mxu0 0
        %1421 = vmatpush1.bf16.msra.mxu0 0
        %1422 = vmatprep.mubr.bf16.mxu0 0
        %1423 = vmatmul.mubr.bf16.gmra.mrb[0].mxu0 %v1318
        %v1424 = vpop.f32.mrb[0].mxu0
        %v1425 = vadd.f32 %v1341, %v1424
        %v1426 = vpop.f32.mrb[0].mxu0
        %v1427 = vpop.f32.mrb[0].mxu0
        %v1428 = vadd.f32 %v1341, %v1427
        %v1429 = vpop.f32.mrb[0].mxu0
        %1430 = vmatprep.mubr.bf16.mxu0 0
        %1431 = vmatmul.mubr.bf16.gmra.mrb[0].mxu0 %v1319
        %v1432 = vpop.f32.mrb[0].mxu0
        %v1433 = vadd.f32 %v1341, %v1432
        %v1434 = vpop.f32.mrb[0].mxu0
        %v1435 = vpop.f32.mrb[0].mxu0
        %v1436 = vadd.f32 %v1341, %v1435
        %v1437 = vpop.f32.mrb[0].mxu0
        %1438 = vdwg.mxu0
        %v1439 = vmax.f32 %v1425, 0.0
        %v1440 = vmax.f32 %v1428, 0.0
        %v1441 = vmax.f32 %v1433, 0.0
        %v1442 = vmax.f32 %v1436, 0.0
        %v1443 = vpack.c.bf16 %v1440, %v1439
        %v1444 = vpack.c.bf16 %v1442, %v1441
        %s1445 = scalar_lea.vmem [#allocation2], 576
        %v1446 = vld [vmem:[%s1445] sm:$0xf]
        %v1447 = vld [vmem:[%s1445 + $0x4] sm:$0xf]
        %v1448 = vld [vmem:[%s1445 + $0x8] sm:$0xf]
        %v1449 = vld [vmem:[%s1445 + $0xc] sm:$0xf]
        %v1450 = vld [vmem:[%s1445 + $0x10] sm:$0xf]
        %v1451 = vld [vmem:[%s1445 + $0x14] sm:$0xf]
        %v1452 = vld [vmem:[%s1445 + $0x18] sm:$0xf]
        %v1453 = vld [vmem:[%s1445 + $0x1c] sm:$0xf]
        %v1454 = vld [vmem:[%s1445 + $0x20] sm:$0xf]
        %v1455 = vld [vmem:[%s1445 + $0x24] sm:$0xf]
        %v1456 = vld [vmem:[%s1445 + $0x28] sm:$0xf]
        %v1457 = vld [vmem:[%s1445 + $0x2c] sm:$0xf]
        %v1458 = vld [vmem:[%s1445 + $0x30] sm:$0xf]
        %v1459 = vld [vmem:[%s1445 + $0x34] sm:$0xf]
        %v1460 = vld [vmem:[%s1445 + $0x38] sm:$0xf]
        %v1461 = vld [vmem:[%s1445 + $0x3c] sm:$0xf]
        %v1462 = vld [vmem:[%s3 + $0x9] sm:$0x1]
        %v1463 = vlaneseq
        %v1464 = vshrl.u32 %v1463, 7
        %v1465 = vsub.s32 0, %v1464
        %v1466 = vrot.slane %v1462, %v1465
        %v1483 = vunpack.c.l.b16 %v1446
        %v1484 = vunpack.c.l.b16 %v1447
        %v1485 = vunpack.c.l.b16 %v1448
        %v1486 = vunpack.c.l.b16 %v1449
        %v1487 = vunpack.c.l.b16 %v1450
        %v1488 = vunpack.c.l.b16 %v1451
        %v1489 = vunpack.c.l.b16 %v1452
        %v1490 = vunpack.c.l.b16 %v1453
        %v1491 = vunpack.c.l.b16 %v1454
        %v1492 = vunpack.c.l.b16 %v1455
        %v1493 = vunpack.c.l.b16 %v1456
        %v1494 = vunpack.c.l.b16 %v1457
        %v1495 = vunpack.c.l.b16 %v1458
        %v1496 = vunpack.c.l.b16 %v1459
        %v1497 = vunpack.c.l.b16 %v1460
        %v1498 = vunpack.c.l.b16 %v1461
        %v1499 = vpack.c.b16 %v1484, %v1483
        %v1500 = vpack.c.b16 %v1486, %v1485
        %v1501 = vpack.c.b16 %v1488, %v1487
        %v1502 = vpack.c.b16 %v1490, %v1489
        %v1503 = vpack.c.b16 %v1492, %v1491
        %v1504 = vpack.c.b16 %v1494, %v1493
        %v1505 = vpack.c.b16 %v1496, %v1495
        %v1506 = vpack.c.b16 %v1498, %v1497
        %1515 = vmatprep.subr.bf16.mxu0 0
        %1516 = vmatpush1.bf16.msra.mxu0 %v1499
        %1517 = vmatprep.subr.bf16.mxu0 0
        %1518 = vmatpush1.bf16.msra.mxu0 %v1500
        %1519 = vmatprep.subr.bf16.mxu0 0
        %1520 = vmatpush1.bf16.msra.mxu0 %v1501
        %1521 = vmatprep.subr.bf16.mxu0 0
        %1522 = vmatpush1.bf16.msra.mxu0 %v1502
        %1523 = vmatprep.subr.bf16.mxu0 0
        %1524 = vmatpush1.bf16.msra.mxu0 %v1503
        %1525 = vmatprep.subr.bf16.mxu0 0
        %1526 = vmatpush1.bf16.msra.mxu0 %v1504
        %1527 = vmatprep.subr.bf16.mxu0 0
        %1528 = vmatpush1.bf16.msra.mxu0 %v1505
        %1529 = vmatprep.subr.bf16.mxu0 0
        %1530 = vmatpush1.bf16.msra.mxu0 %v1506
        %1531 = vmatprep.subr.bf16.mxu0 0
        %1532 = vmatpush1.bf16.msra.mxu0 0
        %1533 = vmatprep.subr.bf16.mxu0 0
        %1534 = vmatpush1.bf16.msra.mxu0 0
        %1535 = vmatprep.subr.bf16.mxu0 0
        %1536 = vmatpush1.bf16.msra.mxu0 0
        %1537 = vmatprep.subr.bf16.mxu0 0
        %1538 = vmatpush1.bf16.msra.mxu0 0
        %1539 = vmatprep.subr.bf16.mxu0 0
        %1540 = vmatpush1.bf16.msra.mxu0 0
        %1541 = vmatprep.subr.bf16.mxu0 0
        %1542 = vmatpush1.bf16.msra.mxu0 0
        %1543 = vmatprep.subr.bf16.mxu0 0
        %1544 = vmatpush1.bf16.msra.mxu0 0
        %1545 = vmatprep.subr.bf16.mxu0 0
        %1546 = vmatpush1.bf16.msra.mxu0 0
        %1547 = vmatprep.mubr.bf16.mxu0 0
        %1548 = vmatmul.mubr.bf16.gmra.mrb[0].mxu0 %v1443
        %v1549 = vpop.f32.mrb[0].mxu0
        %v1550 = vadd.f32 %v1466, %v1549
        %v1551 = vpop.f32.mrb[0].mxu0
        %v1552 = vpop.f32.mrb[0].mxu0
        %v1553 = vadd.f32 %v1466, %v1552
        %v1554 = vpop.f32.mrb[0].mxu0
        %1555 = vmatprep.mubr.bf16.mxu0 0
        %1556 = vmatmul.mubr.bf16.gmra.mrb[0].mxu0 %v1444
        %v1557 = vpop.f32.mrb[0].mxu0
        %v1558 = vadd.f32 %v1466, %v1557
        %v1559 = vpop.f32.mrb[0].mxu0
        %v1560 = vpop.f32.mrb[0].mxu0
        %v1561 = vadd.f32 %v1466, %v1560
        %v1562 = vpop.f32.mrb[0].mxu0
        %1563 = vdwg.mxu0
        %v1564 = vmax.f32 %v1550, 0.0
        %v1565 = vmax.f32 %v1553, 0.0
        %v1566 = vmax.f32 %v1558, 0.0
        %v1567 = vmax.f32 %v1561, 0.0
        %v1568 = vadd.f32 %v1564, %v852
        %v1569 = vadd.f32 %v1565, %v855
        %v1570 = vadd.f32 %v1566, %v860
        %v1571 = vadd.f32 %v1567, %v863
        %1572 = vst [vmem:[%s222] sm:$0xff] %v1568
        %1573 = vst [vmem:[%s222 + $0x8] sm:$0xff] %v1569
        %1574 = vst [vmem:[%s222 + $0x10] sm:$0xff] %v1570
        %1575 = vst [vmem:[%s222 + $0x18] sm:$0xff] %v1571
        %s1576 = sand.u32 %s121, 1
        %s1577 = scalar_lea.sflag [#allocation4], %s1576
        %s1578 = sand.u32 %s121, 1
        %s1579 = smul.addr %s1578, 32
        %s1580 = scalar_lea.vmem [#allocation5], %s1579
        // Predicated region
        $region41: #{_vae_call.1} parent=35 // pred_check
          %p1581 = pneg %p131
        $region42: #{_vae_call.1} parent=35 // pred_check_branch
          %1583 = sbr.rel (%p1581) target = $region44
        $region43: #{_vae_call.1} parent=35 // pred_region
          %s1584 = smul.u32 4, %s19
          %s1586 = ssub.s32 512, 512
          %1587 = vsyncadd %s1577, %s1586
          %s1588 = smul.addr %s1584, 128
          %s1589 = scalar_lea.hbm %s4, %s1588
          %s1590 = sshll.u32 %s1580, 4
          %s1591 = int_to_ptr.vmem [resolvable:$true] %s1590
          %1596 = dma.vmem_to_hbm [thread:$0]  %s1591, 512, %s1589, %s1577, 128, 128, 8
        $region44: #{_vae_call.1} parent=35 // pred_fallthru
          _
      $region36: #{_vae_call.1} parent=5 // pred_fallthru
        _
      %p1597 = scmp.le.s32.totalorder 2, %s14
      // Predicated region
      $region45: #{_vae_call.1} parent=5 // pred_check
        %p1598 = pneg %p1597
      $region46: #{_vae_call.1} parent=5 // pred_check_branch
        %1600 = sbr.rel (%p1598) target = $region48
      $region47: #{_vae_call.1} parent=5 // pred_region
        %s1601 = ssub.s32 %s14, 2
        // Predicated region
        $region49: #{_vae_call.1} parent=47 // pred_check
          %p1602 = pneg %p137
        $region50: #{_vae_call.1} parent=47 // pred_check_branch
          %1604 = sbr.rel (%p1602) target = $region52
        $region51: #{_vae_call.1} parent=47 // pred_region
          %s1605 = sand.u32 %s122, 1
          %s1606 = scalar_lea.sflag [#allocation4], %s1605
          %s1607 = sand.u32 %s122, 1
          %s1608 = smul.addr %s1607, 32
          %s1609 = scalar_lea.vmem [#allocation5], %s1608
          %1610 = dma.done %s1606, 512
        $region52: #{_vae_call.1} parent=47 // pred_fallthru
          _
      $region48: #{_vae_call.1} parent=5 // pred_fallthru
        _
    $region6: #{_vae_call.1} parent=1 // loop_footer
      %s18 = sadd.s32 1, %s14
    $region7: #{_vae_call.1} parent=1 // loop_footer_branch
      %13 = sbr.rel target = $region3
    $region8: #{_vae_call.1} parent=1 // loop_exit
      _
    %1611 = vsyncpa [#allocation3], 1
    %s1612 = scalar_lea.sflag [#allocation3], 1
    %1613 = vsyncpa %s1612, 1
    %1614 = vsyncpa [#allocation4], 1
    %s1615 = scalar_lea.sflag [#allocation4], 1
    %1616 = vsyncpa %s1615, 1

</llo_original>
